<compile_context>
chip_gen: v6e
topology: v6e:2x2x1
jax: 0.10.0
libtpu: 0.0.40
codegen_flags: <defaults>
</compile_context>

<pallas_src>
import functools

import jax
import jax.numpy as jnp
from jax.experimental import pallas as pl
from jax.experimental.pallas import tpu as pltpu

IN_FEATURES = 1547
IN_PAD = 1664             # 13 * 128 : lane-aligned contraction dim
HIDDEN1 = 256
HIDDEN2 = 64
BRANCH_PAD = 2 * HIDDEN2  # 128 : [advantage hidden | value hidden]
OUT_PAD = 128             # lane-dense output width (n_actions padded)


def _round_up(n, m):
    return (n + m - 1) // m * m


def _cdiv(a, b):
    return (a + b - 1) // b


def dueling_kernel(x_ref, w1_ref, b1_ref, wav_ref, bav_ref,
                   wa2_ref, ba2_ref, wv2_ref, bv2_ref, q_ref,
                   *, inv_n_actions):
    # Trunk: Linear(1664 -> 256) + ReLU.  bf16 x @ bf16 W1 -> f32 on the MXU.
    h = jnp.dot(x_ref[...], w1_ref[...], preferred_element_type=jnp.float32)
    h = jnp.maximum(h + b1_ref[...], 0.0)                     # (TB, 256) f32

    # Fused branch first layers: one lane-dense bf16 (256, 128) matmul [Wa|Wv].
    hav = jnp.dot(h.astype(jnp.bfloat16), wav_ref[...],
                  preferred_element_type=jnp.float32)
    hav = jnp.maximum(hav + bav_ref[...], 0.0)                # (TB, 128) f32

    # Advantage head: (TB,128) @ (128,128) bf16.  Rows 64: and cols n_actions:
    # of the packed weight/bias are zero, so this equals
    # relu(h@Wa+ba) @ Wa2 + ba2 exactly (padded lanes are exactly zero).
    a = jnp.dot(hav.astype(jnp.bfloat16), wa2_ref[...],
                preferred_element_type=jnp.float32) + ba2_ref[...]

    # Value head: 1-wide output -> VPU multiply + XLU row-reduce (no MXU pass).
    # wv2_row is zero in the advantage lanes, so only the value hidden counts.
    v = jnp.sum(hav * wv2_ref[...], axis=1, keepdims=True) + bv2_ref[...]

    # Dueling combine.  Padded advantage columns are exactly zero, so the sum
    # over all 128 lanes divided by the true n_actions equals the mean.
    a_mean = jnp.sum(a, axis=1, keepdims=True) * inv_n_actions
    q_ref[...] = (v + a - a_mean).astype(q_ref.dtype)


@functools.partial(jax.jit, static_argnames=("n_actions",))
def dueling_forward(x, packed, *, n_actions):
    (w1, b1, wav, bav, wa2, ba2, wv2, bv2) = packed
    B, F = x.shape

    # Batch tiling policy:
    #   * B < 64   : one tile, rounded to 16 rows (bf16 sublane packing).
    #   * B >= 64  : at least 2 tiles (keeps both v7x TensorCores busy via the
    #                "parallel" grid axis), capped at 512 rows/tile which is
    #                the sweet spot for DMA pipelining on v5e/v6e single TC.
    if B < 64:
        tb = _round_up(max(B, 1), 16)
    else:
        tb = min(512, _round_up(_cdiv(B, 2), 16))
    b_pad = _round_up(B, tb)

    # Cast-then-pad; with allow_input_fusion XLA may fold this straight into
    # the pallas_call x operand (no separate staging pass over x in HBM).
    x_p = jnp.pad(x.astype(jnp.bfloat16), ((0, b_pad - B), (0, IN_PAD - F)))

    def const(shape):
        # Constant block index -> weight tile stays VMEM-resident across grid.
        return pl.BlockSpec(shape, lambda i: (0, 0))

    flops = (2 * b_pad * (IN_PAD * HIDDEN1 + HIDDEN1 * BRANCH_PAD
                          + BRANCH_PAD * OUT_PAD + BRANCH_PAD)
             + 6 * b_pad * OUT_PAD)
    bytes_accessed = (b_pad * IN_PAD * 2            # x (bf16)
                      + b_pad * OUT_PAD * 4         # q (f32)
                      + IN_PAD * HIDDEN1 * 2        # W1 (bf16)
                      + HIDDEN1 * BRANCH_PAD * 2    # [Wa|Wv] (bf16)
                      + BRANCH_PAD * OUT_PAD * 2    # Wa2 (bf16)
                      + (HIDDEN1 + 3 * BRANCH_PAD + 1) * 4)   # biases, wv2

    q_pad = pl.pallas_call(
        functools.partial(dueling_kernel, inv_n_actions=1.0 / n_actions),
        out_shape=jax.ShapeDtypeStruct((b_pad, OUT_PAD), jnp.float32),
        grid=(b_pad // tb,),
        in_specs=[
            pl.BlockSpec((tb, IN_PAD), lambda i: (i, 0)),   # x tile (bf16)
            const((IN_PAD, HIDDEN1)),                       # W1 (bf16, padded)
            const((1, HIDDEN1)),                            # b1
            const((HIDDEN1, BRANCH_PAD)),                   # [Wa | Wv] (bf16)
            const((1, BRANCH_PAD)),                         # [ba | bv]
            const((BRANCH_PAD, OUT_PAD)),                   # Wa2 (bf16, 0-pad)
            const((1, OUT_PAD)),                            # ba2 (zero-padded)
            const((1, BRANCH_PAD)),                         # wv2 row (padded)
            const((1, 1)),                                  # bv2
        ],
        out_specs=pl.BlockSpec((tb, OUT_PAD), lambda i: (i, 0)),
        compiler_params=pltpu.CompilerParams(
            dimension_semantics=("parallel",),
            # Only the x operand (index 0) is a fusion candidate.
            allow_input_fusion=[True] + [False] * 8),
        cost_estimate=pl.CostEstimate(flops=flops, transcendentals=0,
                                      bytes_accessed=bytes_accessed),
    )(x_p, w1, b1, wav, bav, wa2, ba2, wv2, bv2)

    return q_pad[:B, :n_actions]


def init_params(key, n_actions):
    """Raw params mirroring the PyTorch module (stored transposed, (in,out)).

    Weights: kaiming_normal_ (std = sqrt(2 / fan_in)); biases: PyTorch Linear
    default uniform(-1/sqrt(fan_in), 1/sqrt(fan_in)). Biases kept 2D (1, out).
    """
    ks = jax.random.split(key, 10)

    def kaiming(k, fan_in, fan_out):
        std = (2.0 / fan_in) ** 0.5
        return jax.random.normal(k, (fan_in, fan_out), jnp.float32) * std

    def bias(k, fan_in, fan_out):
        bound = 1.0 / (fan_in ** 0.5)
        return jax.random.uniform(k, (1, fan_out), jnp.float32, -bound, bound)

    w1 = kaiming(ks[0], IN_FEATURES, HIDDEN1)
    b1 = bias(ks[1], IN_FEATURES, HIDDEN1)
    wa = kaiming(ks[2], HIDDEN1, HIDDEN2)
    ba = bias(ks[3], HIDDEN1, HIDDEN2)
    wa2 = kaiming(ks[4], HIDDEN2, n_actions)
    ba2 = bias(ks[5], HIDDEN2, n_actions)
    wv = kaiming(ks[6], HIDDEN1, HIDDEN2)
    bv = bias(ks[7], HIDDEN1, HIDDEN2)
    wv2 = kaiming(ks[8], HIDDEN2, 1)
    bv2 = bias(ks[9], HIDDEN2, 1)
    return (w1, b1, wa, ba, wa2, ba2, wv, bv, wv2, bv2)


def pack_params(params, n_actions):
    """One-time repack of raw params into the kernel's padded/fused layout."""
    (w1, b1, wa, ba, wa2, ba2, wv, bv, wv2, bv2) = params

    # W1: bf16, feature axis zero-padded 1547 -> 1664.
    w1_p = jnp.zeros((IN_PAD, HIDDEN1), jnp.bfloat16)
    w1_p = w1_p.at[:IN_FEATURES, :].set(w1.astype(jnp.bfloat16))

    # Branch first layers fused: [Wa | Wv] -> (256, 128), bf16.
    wav = jnp.concatenate([wa, wv], axis=1).astype(jnp.bfloat16)
    bav = jnp.concatenate([ba, bv], axis=1).astype(jnp.float32)

    # Advantage second layer, padded to a dense (128, 128) bf16 matmul.
    wa2_p = jnp.zeros((BRANCH_PAD, OUT_PAD), jnp.bfloat16)
    wa2_p = wa2_p.at[:HIDDEN2, :n_actions].set(wa2.astype(jnp.bfloat16))
    ba2_p = jnp.zeros((1, OUT_PAD), jnp.float32)
    ba2_p = ba2_p.at[:, :n_actions].set(ba2)

    # Value second layer as a broadcast row over the fused branch activations.
    wv2_row = jnp.zeros((1, BRANCH_PAD), jnp.float32)
    wv2_row = wv2_row.at[:, HIDDEN2:].set(wv2.reshape(1, HIDDEN2))

    # Dueling-mean invariant: the 128-lane sum / n_actions mean in the kernel
    # requires every padded advantage lane to be exactly zero.
    assert bool(jnp.all(wa2_p[:, n_actions:] == 0)), "wa2 padding not zero"
    assert bool(jnp.all(wa2_p[HIDDEN2:, :] == 0)), "wa2 row padding not zero"
    assert bool(jnp.all(ba2_p[:, n_actions:] == 0)), "ba2 padding not zero"
    assert bool(jnp.all(wv2_row[:, :HIDDEN2] == 0)), "wv2 adv lanes not zero"

    return (w1_p, b1.astype(jnp.float32), wav, bav, wa2_p, ba2_p,
            wv2_row, bv2.astype(jnp.float32))


def reference_forward(x, params):
    """Pure-JAX reference with the same bf16 weight quantization as the kernel."""
    (w1, b1, wa, ba, wa2, ba2, wv, bv, wv2, bv2) = params

    def mm(a, b):
        return jnp.dot(a.astype(jnp.bfloat16), b.astype(jnp.bfloat16),
                       preferred_element_type=jnp.float32)

    h = jax.nn.relu(mm(x, w1) + b1)
    ha = jax.nn.relu(mm(h, wa) + ba)
    a = mm(ha, wa2) + ba2
    hv = jax.nn.relu(mm(h, wv) + bv)
    v = hv @ wv2 + bv2
    return v + a - jnp.mean(a, axis=1, keepdims=True)


if __name__ == "__main__":
    key = jax.random.PRNGKey(0)
    k_x, k_x2, k_p = jax.random.split(key, 3)

    n_actions = 8
    params = init_params(k_p, n_actions)
    packed = pack_params(params, n_actions)

    # Small-batch inference path (single tile).
    batch = 2
    x = jax.random.normal(k_x, (batch, IN_FEATURES), jnp.float32)
    q = jax.block_until_ready(dueling_forward(x, packed, n_actions=n_actions))
    q_ref = reference_forward(x, params)
    assert q.shape == (batch, n_actions)
    assert jnp.allclose(q, q_ref, atol=2e-3, rtol=2e-3), "mismatch (B=2)"

    # Multi-tile path (grid >= 2, padded batch rows exercised).
    batch2 = 200
    x2 = jax.random.normal(k_x2, (batch2, IN_FEATURES), jnp.float32)
    q2 = jax.block_until_ready(dueling_forward(x2, packed, n_actions=n_actions))
    q2_ref = reference_forward(x2, params)
    assert q2.shape == (batch2, n_actions)
    assert jnp.allclose(q2, q2_ref, atol=2e-3, rtol=2e-3), "mismatch (B=200)"

    print("KERNEL_OK")
</pallas_src>

<mosaic_0001>
module attributes {stable_mosaic.version = 11 : i64} {
  func.func @dueling_kernel(%arg0: i32, %arg1: memref<16x1664xbf16, #tpu.memory_space<vmem>>, %arg2: memref<1664x256xbf16, #tpu.memory_space<vmem>>, %arg3: memref<1x256xf32, #tpu.memory_space<vmem>>, %arg4: memref<256x128xbf16, #tpu.memory_space<vmem>>, %arg5: memref<1x128xf32, #tpu.memory_space<vmem>>, %arg6: memref<128x128xbf16, #tpu.memory_space<vmem>>, %arg7: memref<1x128xf32, #tpu.memory_space<vmem>>, %arg8: memref<1x128xf32, #tpu.memory_space<vmem>>, %arg9: memref<1x1xf32, #tpu.memory_space<vmem>>, %arg10: memref<16x128xf32, #tpu.memory_space<vmem>>) attributes {dimension_semantics = [#tpu.dimension_semantics<parallel>], iteration_bounds = array<i64: 1>, scalar_prefetch = 0 : i64, scratch_operands = 0 : i64, tpu.core_type = #tpu.core_type<tc>, window_params = [{transform_indices = @transform_0, window_bounds = array<i64: 16, 1664>}, {pipeline_mode = #tpu.pipeline_mode<synchronous>, transform_indices = @transform_1, window_bounds = array<i64: 1664, 256>}, {pipeline_mode = #tpu.pipeline_mode<synchronous>, transform_indices = @transform_2, window_bounds = array<i64: 1, 256>}, {pipeline_mode = #tpu.pipeline_mode<synchronous>, transform_indices = @transform_3, window_bounds = array<i64: 256, 128>}, {pipeline_mode = #tpu.pipeline_mode<synchronous>, transform_indices = @transform_4, window_bounds = array<i64: 1, 128>}, {pipeline_mode = #tpu.pipeline_mode<synchronous>, transform_indices = @transform_5, window_bounds = array<i64: 128, 128>}, {pipeline_mode = #tpu.pipeline_mode<synchronous>, transform_indices = @transform_6, window_bounds = array<i64: 1, 128>}, {pipeline_mode = #tpu.pipeline_mode<synchronous>, transform_indices = @transform_7, window_bounds = array<i64: 1, 128>}, {pipeline_mode = #tpu.pipeline_mode<synchronous>, transform_indices = @transform_8, window_bounds = array<i64: 1, 1>}, {transform_indices = @transform_9, window_bounds = array<i64: 16, 128>}]} {
    %c0 = arith.constant 0 : index
    %c0_0 = arith.constant 0 : index
    %0 = vector.load %arg1[%c0, %c0_0] : memref<16x1664xbf16, #tpu.memory_space<vmem>>, vector<16x1664xbf16>
    %c0_1 = arith.constant 0 : index
    %c0_2 = arith.constant 0 : index
    %1 = vector.load %arg2[%c0_1, %c0_2] : memref<1664x256xbf16, #tpu.memory_space<vmem>>, vector<1664x256xbf16>
    %cst = arith.constant dense<0.000000e+00> : vector<16x256xf32>
    %2 = tpu.matmul %0, %1, %cst {dimension_numbers = #tpu.dot_dimension_numbers<[1], [0], [0], [1], [0, 0, 1, 1], [], []>} : vector<16x1664xbf16>, vector<1664x256xbf16>, vector<16x256xf32> -> vector<16x256xf32>
    %c0_3 = arith.constant 0 : index
    %c0_4 = arith.constant 0 : index
    %3 = vector.load %arg3[%c0_3, %c0_4] : memref<1x256xf32, #tpu.memory_space<vmem>>, vector<1x256xf32>
    %4 = vector.broadcast %3 : vector<1x256xf32> to vector<16x256xf32>
    %5 = arith.addf %2, %4 : vector<16x256xf32>
    %cst_5 = arith.constant 0.000000e+00 : f32
    %6 = vector.broadcast %cst_5 : f32 to vector<16x256xf32>
    %7 = arith.maximumf %5, %6 : vector<16x256xf32>
    %8 = arith.truncf %7 : vector<16x256xf32> to vector<16x256xbf16>
    %c0_6 = arith.constant 0 : index
    %c0_7 = arith.constant 0 : index
    %9 = vector.load %arg4[%c0_6, %c0_7] : memref<256x128xbf16, #tpu.memory_space<vmem>>, vector<256x128xbf16>
    %cst_8 = arith.constant dense<0.000000e+00> : vector<16x128xf32>
    %10 = tpu.matmul %8, %9, %cst_8 {dimension_numbers = #tpu.dot_dimension_numbers<[1], [0], [0], [1], [0, 0, 1, 1], [], []>} : vector<16x256xbf16>, vector<256x128xbf16>, vector<16x128xf32> -> vector<16x128xf32>
    %c0_9 = arith.constant 0 : index
    %c0_10 = arith.constant 0 : index
    %11 = vector.load %arg5[%c0_9, %c0_10] : memref<1x128xf32, #tpu.memory_space<vmem>>, vector<1x128xf32>
    %12 = vector.broadcast %11 : vector<1x128xf32> to vector<16x128xf32>
    %13 = arith.addf %10, %12 : vector<16x128xf32>
    %cst_11 = arith.constant 0.000000e+00 : f32
    %14 = vector.broadcast %cst_11 : f32 to vector<16x128xf32>
    %15 = arith.maximumf %13, %14 : vector<16x128xf32>
    %16 = arith.truncf %15 : vector<16x128xf32> to vector<16x128xbf16>
    %c0_12 = arith.constant 0 : index
    %c0_13 = arith.constant 0 : index
    %17 = vector.load %arg6[%c0_12, %c0_13] : memref<128x128xbf16, #tpu.memory_space<vmem>>, vector<128x128xbf16>
    %cst_14 = arith.constant dense<0.000000e+00> : vector<16x128xf32>
    %18 = tpu.matmul %16, %17, %cst_14 {dimension_numbers = #tpu.dot_dimension_numbers<[1], [0], [0], [1], [0, 0, 1, 1], [], []>} : vector<16x128xbf16>, vector<128x128xbf16>, vector<16x128xf32> -> vector<16x128xf32>
    %c0_15 = arith.constant 0 : index
    %c0_16 = arith.constant 0 : index
    %19 = vector.load %arg7[%c0_15, %c0_16] : memref<1x128xf32, #tpu.memory_space<vmem>>, vector<1x128xf32>
    %20 = vector.broadcast %19 : vector<1x128xf32> to vector<16x128xf32>
    %21 = arith.addf %18, %20 : vector<16x128xf32>
    %c0_17 = arith.constant 0 : index
    %c0_18 = arith.constant 0 : index
    %22 = vector.load %arg8[%c0_17, %c0_18] : memref<1x128xf32, #tpu.memory_space<vmem>>, vector<1x128xf32>
    %23 = vector.broadcast %22 : vector<1x128xf32> to vector<16x128xf32>
    %24 = arith.mulf %15, %23 : vector<16x128xf32>
    %cst_19 = arith.constant dense<0.000000e+00> : vector<16xf32>
    %25 = vector.multi_reduction <add>, %24, %cst_19 [1] : vector<16x128xf32> to vector<16xf32>
    %26 = vector.shape_cast %25 : vector<16xf32> to vector<16x1xf32>
    %c0_20 = arith.constant 0 : index
    %c0_21 = arith.constant 0 : index
    %27 = vector.load %arg9[%c0_20, %c0_21] : memref<1x1xf32, #tpu.memory_space<vmem>>, vector<1x1xf32>
    %28 = vector.broadcast %27 : vector<1x1xf32> to vector<16x1xf32>
    %29 = arith.addf %26, %28 : vector<16x1xf32>
    %cst_22 = arith.constant dense<0.000000e+00> : vector<16xf32>
    %30 = vector.multi_reduction <add>, %21, %cst_22 [1] : vector<16x128xf32> to vector<16xf32>
    %31 = vector.shape_cast %30 : vector<16xf32> to vector<16x1xf32>
    %cst_23 = arith.constant 1.250000e-01 : f32
    %32 = vector.broadcast %cst_23 : f32 to vector<16x1xf32>
    %33 = arith.mulf %31, %32 : vector<16x1xf32>
    %34 = vector.broadcast %29 : vector<16x1xf32> to vector<16x128xf32>
    %35 = arith.addf %34, %21 : vector<16x128xf32>
    %36 = vector.broadcast %33 : vector<16x1xf32> to vector<16x128xf32>
    %37 = arith.subf %35, %36 : vector<16x128xf32>
    %c0_24 = arith.constant 0 : index
    %c0_25 = arith.constant 0 : index
    %38 = vector.load %arg10[%c0_24, %c0_25] : memref<16x128xf32, #tpu.memory_space<vmem>>, vector<16x128xf32>
    tpu.vector_store %arg10[%c0_24, %c0_25], %37 {strides = array<i32>} : memref<16x128xf32, #tpu.memory_space<vmem>>, vector<16x128xf32>,
    return
  }
  func.func @transform_0(%arg0: i32) -> (i32, i32) {
    %c0_i32 = arith.constant 0 : i32
    %c0_i32_0 = arith.constant 0 : i32
    return %arg0, %c0_i32 : i32, i32
  }
  func.func @transform_1(%arg0: i32) -> (i32, i32) {
    %c0_i32 = arith.constant 0 : i32
    %c0_i32_0 = arith.constant 0 : i32
    %c0_i32_1 = arith.constant 0 : i32
    return %c0_i32, %c0_i32_0 : i32, i32
  }
  func.func @transform_2(%arg0: i32) -> (i32, i32) {
    %c0_i32 = arith.constant 0 : i32
    %c0_i32_0 = arith.constant 0 : i32
    %c0_i32_1 = arith.constant 0 : i32
    return %c0_i32, %c0_i32_0 : i32, i32
  }
  func.func @transform_3(%arg0: i32) -> (i32, i32) {
    %c0_i32 = arith.constant 0 : i32
    %c0_i32_0 = arith.constant 0 : i32
    %c0_i32_1 = arith.constant 0 : i32
    return %c0_i32, %c0_i32_0 : i32, i32
  }
  func.func @transform_4(%arg0: i32) -> (i32, i32) {
    %c0_i32 = arith.constant 0 : i32
    %c0_i32_0 = arith.constant 0 : i32
    %c0_i32_1 = arith.constant 0 : i32
    return %c0_i32, %c0_i32_0 : i32, i32
  }
  func.func @transform_5(%arg0: i32) -> (i32, i32) {
    %c0_i32 = arith.constant 0 : i32
    %c0_i32_0 = arith.constant 0 : i32
    %c0_i32_1 = arith.constant 0 : i32
    return %c0_i32, %c0_i32_0 : i32, i32
  }
  func.func @transform_6(%arg0: i32) -> (i32, i32) {
    %c0_i32 = arith.constant 0 : i32
    %c0_i32_0 = arith.constant 0 : i32
    %c0_i32_1 = arith.constant 0 : i32
    return %c0_i32, %c0_i32_0 : i32, i32
  }
  func.func @transform_7(%arg0: i32) -> (i32, i32) {
    %c0_i32 = arith.constant 0 : i32
    %c0_i32_0 = arith.constant 0 : i32
    %c0_i32_1 = arith.constant 0 : i32
    return %c0_i32, %c0_i32_0 : i32, i32
  }
  func.func @transform_8(%arg0: i32) -> (i32, i32) {
    %c0_i32 = arith.constant 0 : i32
    %c0_i32_0 = arith.constant 0 : i32
    %c0_i32_1 = arith.constant 0 : i32
    return %c0_i32, %c0_i32_0 : i32, i32
  }
  func.func @transform_9(%arg0: i32) -> (i32, i32) {
    %c0_i32 = arith.constant 0 : i32
    %c0_i32_0 = arith.constant 0 : i32
    return %arg0, %c0_i32 : i32, i32
  }
}

</mosaic_0001>

<llo_original>
// kernel: dueling_forward.2
$region0: #{dueling_forward.2}
  #allocation0 [shape = 'u32[]', space=smem, size = 0x4, offset = 0x4, fixed_abs, tag = 'smem constant byte address 0x4 - core index']
  #allocation1 [shape = 'u32[144,128]{1,0:T(1,128)}', space=vmem, size = 0x12000, scoped, tag = 'internal scratch']
  #allocation2 [shape = 'u32[2048]{0}', space=vmem, size = 0x2000, scoped, tag = 'scoped memory for dueling_forward.2']
  #allocation3 [shape = 'u32[2048]{0}', space=vmem, size = 0x2000, scoped, tag = 'scoped memory for dueling_forward.2']
  #allocation4 [shape = 'u32[2048]{0}', space=vmem, size = 0x2000, scoped, tag = 'scoped memory for dueling_forward.2']
  #allocation5 [shape = 'u32[2048]{0}', space=vmem, size = 0x2000, scoped, tag = 'scoped memory for dueling_forward.2']
  #allocation6 [shape = 'u32[2048]{0}', space=vmem, size = 0x2000, scoped, tag = 'scoped memory for dueling_forward.2']
  #allocation7 [shape = 'f32[1,1]{1,0:T(1,128)S(1)}', space=vmem, size = 0x200, scoped, tag = 'scoped memory for dueling_forward.2']
  %s0 = inlined_call_operand.hbm [shape: bf16[1664,256], index: 0, kind: input, shape index: {}]
  %s1 = inlined_call_operand.vmem [shape: f32[1,256], index: 1, kind: input, shape index: {}]
  %s2 = inlined_call_operand.hbm [shape: bf16[256,128], index: 2, kind: input, shape index: {}]
  %s3 = inlined_call_operand.vmem [shape: f32[1,128], index: 3, kind: input, shape index: {}]
  %s4 = inlined_call_operand.hbm [shape: bf16[128,128], index: 4, kind: input, shape index: {}]
  %s5 = inlined_call_operand.vmem [shape: f32[1,128], index: 5, kind: input, shape index: {}]
  %s6 = inlined_call_operand.vmem [shape: f32[1,128], index: 6, kind: input, shape index: {}]
  %s7 = inlined_call_operand.<no memory space> [shape: f32[1,1], index: 7, kind: input, shape index: {}]
  %s8 = inlined_call_operand.vmem [shape: bf16[2,1547], index: 8, kind: input, shape index: {}]
  %s9 = inlined_call_operand.<no memory space> [shape: bf16[], index: 9, kind: input, shape index: {}]
  %s10 = inlined_call_operand.vmem [shape: f32[16,128], index: 10, kind: output, shape index: {}]
  %s11 = sld [smem:[#allocation0]]
  $region58: #{dueling_forward.2} parent=0
    _
  %s13 = ssub.s32 1, %s11
  %s14 = scalar_select 0, %s13, %s11
  %v15 = vstv %s9
  %v16 = vunpack.i.l.bf16 %v15
  %v18 = vunpack.i.h.bf16 %v15
  %v20 = vstv %s7
  %21 = vst [vmem:[#allocation7] sm:$0x1] %v20
  $region1: #{dueling_forward.2} parent=0
    #allocation8 [shape = 'u8[851968]{0}', space=vmem, size = 0xd0000, scoped, tag = 'input window, operand 1, single buffered']
    #allocation9 [shape = 's32[1]{0}', space=sflag, size = 0x4, scoped, tag = 'scoped memory for dueling_forward.2']
    #allocation10 [shape = 'u8[65536]{0}', space=vmem, size = 0x10000, scoped, tag = 'input window, operand 3, single buffered']
    #allocation11 [shape = 's32[1]{0}', space=sflag, size = 0x4, scoped, tag = 'scoped memory for dueling_forward.2']
    #allocation12 [shape = 'u8[32768]{0}', space=vmem, size = 0x8000, scoped, tag = 'input window, operand 5, single buffered']
    #allocation13 [shape = 'u8[53248]{0}', space=vmem, size = 0xd000, dematerialized = true, scoped, tag = 'FusionAdapter Buffer %fusion.1 = bf16[16,1664]{1,0:T(8,128)(2,1)} fusion(%param_8.1, %param_9), kind=kLoop, calls=%fused_computation.1.clone, metadata={op_name="jit(dueling_forward)/jit(_pad)/pad" stack_frame_id=8}']
    %22 = vsyncpa [#allocation9], 0
    %23 = vsyncpa [#allocation11], 0
    // Predicated region
    $region2: #{dueling_forward.2} parent=1 // pred_check
      _
    $region3: #{dueling_forward.2} parent=1 // pred_check_branch
      %25 = sbr.rel (0) target = $region5
    $region4: #{dueling_forward.2} parent=1 // pred_region
      _
    $region5: #{dueling_forward.2} parent=1 // pred_fallthru
      _
    // Predicated region
    $region6: #{dueling_forward.2} parent=1 // pred_check
      _
    $region7: #{dueling_forward.2} parent=1 // pred_check_branch
      %27 = sbr.rel (0) target = $region9
    $region8: #{dueling_forward.2} parent=1 // pred_region
      %s29 = ssub.s32 26624, 26624
      %30 = vsyncadd [#allocation9], %s29
      %s31 = sshll.u32 [#allocation8], 4
      %s32 = int_to_ptr.vmem [resolvable:$true] %s31
      %37 = dma.hbm_to_vmem [thread:$0]  %s0, 26624, %s32, [#allocation9], 128, 128, 8
    $region9: #{dueling_forward.2} parent=1 // pred_fallthru
      _
    // Predicated region
    $region10: #{dueling_forward.2} parent=1 // pred_check
      _
    $region11: #{dueling_forward.2} parent=1 // pred_check_branch
      %39 = sbr.rel (0) target = $region13
    $region12: #{dueling_forward.2} parent=1 // pred_region
      _
    $region13: #{dueling_forward.2} parent=1 // pred_fallthru
      _
    // Predicated region
    $region14: #{dueling_forward.2} parent=1 // pred_check
      _
    $region15: #{dueling_forward.2} parent=1 // pred_check_branch
      %41 = sbr.rel (0) target = $region17
    $region16: #{dueling_forward.2} parent=1 // pred_region
      %s43 = ssub.s32 2048, 2048
      %44 = vsyncadd [#allocation11], %s43
      %s45 = sshll.u32 [#allocation10], 4
      %s46 = int_to_ptr.vmem [resolvable:$true] %s45
      %51 = dma.hbm_to_vmem [thread:$0]  %s2, 2048, %s46, [#allocation11], 64, 64, 4
    $region17: #{dueling_forward.2} parent=1 // pred_fallthru
      _
    // Predicated region
    $region18: #{dueling_forward.2} parent=1 // pred_check
      _
    $region19: #{dueling_forward.2} parent=1 // pred_check_branch
      %53 = sbr.rel (0) target = $region21
    $region20: #{dueling_forward.2} parent=1 // pred_region
      _
    $region21: #{dueling_forward.2} parent=1 // pred_fallthru
      _
    // Predicated region
    $region22: #{dueling_forward.2} parent=1 // pred_check
      _
    $region23: #{dueling_forward.2} parent=1 // pred_check_branch
      %55 = sbr.rel (0) target = $region25
    $region24: #{dueling_forward.2} parent=1 // pred_region
      %s57 = ssub.s32 1024, 1024
      %58 = vsyncadd [#allocation11], %s57
      %s59 = sshll.u32 [#allocation12], 4
      %s60 = int_to_ptr.vmem [resolvable:$true] %s59
      %65 = dma.hbm_to_vmem [thread:$0]  %s4, 1024, %s60, [#allocation11], 64, 64, 4
    $region25: #{dueling_forward.2} parent=1 // pred_fallthru
      _
    // Predicated region
    $region26: #{dueling_forward.2} parent=1 // pred_check
      _
    $region27: #{dueling_forward.2} parent=1 // pred_check_branch
      %67 = sbr.rel (0) target = $region29
    $region28: #{dueling_forward.2} parent=1 // pred_region
      _
    $region29: #{dueling_forward.2} parent=1 // pred_fallthru
      _
    // Predicated region
    $region30: #{dueling_forward.2} parent=1 // pred_check
      _
    $region31: #{dueling_forward.2} parent=1 // pred_check_branch
      %69 = sbr.rel (0) target = $region33
    $region32: #{dueling_forward.2} parent=1 // pred_region
      _
    $region33: #{dueling_forward.2} parent=1 // pred_fallthru
      _
    // Predicated region
    $region34: #{dueling_forward.2} parent=1 // pred_check
      _
    $region35: #{dueling_forward.2} parent=1 // pred_check_branch
      %71 = sbr.rel (0) target = $region37
    $region36: #{dueling_forward.2} parent=1 // pred_region
      _
    $region37: #{dueling_forward.2} parent=1 // pred_fallthru
      _
    // Predicated region
    $region38: #{dueling_forward.2} parent=1 // pred_check
      _
    $region39: #{dueling_forward.2} parent=1 // pred_check_branch
      %73 = sbr.rel (0) target = $region41
    $region40: #{dueling_forward.2} parent=1 // pred_region
      %74 = dma.done [#allocation9], 26624
    $region41: #{dueling_forward.2} parent=1 // pred_fallthru
      _
    // Predicated region
    $region42: #{dueling_forward.2} parent=1 // pred_check
      _
    $region43: #{dueling_forward.2} parent=1 // pred_check_branch
      %76 = sbr.rel (0) target = $region45
    $region44: #{dueling_forward.2} parent=1 // pred_region
      %77 = dma.done [#allocation11], 2048
    $region45: #{dueling_forward.2} parent=1 // pred_fallthru
      _
    // Predicated region
    $region46: #{dueling_forward.2} parent=1 // pred_check
      _
    $region47: #{dueling_forward.2} parent=1 // pred_check_branch
      %79 = sbr.rel (0) target = $region49
    $region48: #{dueling_forward.2} parent=1 // pred_region
      %80 = dma.done [#allocation11], 1024
    $region49: #{dueling_forward.2} parent=1 // pred_fallthru
      _
    %s82 = sor.u32 3, 1
    %s83 = sand.u32 %s82, 1
    %v84 = vld [vmem:[%s8] sm:%s83]
    %v85 = vunpack.c.l.bf16 %v84
    %v86 = vunpack.c.h.bf16 %v84
    %v87 = vlaneseq
    %v88 = vshrl.u32 %v87, 7
    %vm90 = vcmp.lt.s32.totalorder %v88, 2
    %v91 = vsel %vm90, %v85, %v16
    %v92 = vlaneseq
    %v93 = vand.u32 %v92, 127
    %vm95 = vcmp.lt.s32.totalorder %v93, 1547
    %v96 = vsel %vm95, %v91, %v16
    %v97 = vpack.c.bf16 0.0, %v96
    %s99 = ssub.s32 16, 1
    %100 = vst [vmem:[#allocation13] sm:%s99] %v97
    %s101 = scalar_lea.vmem %s8, 1
    %s103 = sor.u32 3, 1
    %s104 = sand.u32 %s103, 1
    %v105 = vld [vmem:[%s101] sm:%s104]
    %v106 = vunpack.c.l.bf16 %v105
    %v107 = vunpack.c.h.bf16 %v105
    %v108 = vlaneseq
    %v109 = vshrl.u32 %v108, 7
    %vm111 = vcmp.lt.s32.totalorder %v109, 2
    %v112 = vsel %vm111, %v106, %v16
    %v113 = vlaneseq
    %v114 = vand.u32 %v113, 127
    %v115 = vadd.s32 %v114, 128
    %vm116 = vcmp.lt.s32.totalorder %v115, 1547
    %v117 = vsel %vm116, %v112, %v16
    %s118 = scalar_lea.vmem [#allocation13], 4
    %v119 = vpack.c.bf16 0.0, %v117
    %s121 = ssub.s32 16, 1
    %122 = vst [vmem:[%s118] sm:%s121] %v119
    %s123 = scalar_lea.vmem %s8, 2
    %s125 = sor.u32 3, 1
    %s126 = sand.u32 %s125, 1
    %v127 = vld [vmem:[%s123] sm:%s126]
    %v128 = vunpack.c.l.bf16 %v127
    %v129 = vunpack.c.h.bf16 %v127
    %v130 = vlaneseq
    %v131 = vshrl.u32 %v130, 7
    %vm133 = vcmp.lt.s32.totalorder %v131, 2
    %v134 = vsel %vm133, %v128, %v16
    %v135 = vlaneseq
    %v136 = vand.u32 %v135, 127
    %v137 = vadd.s32 %v136, 256
    %vm138 = vcmp.lt.s32.totalorder %v137, 1547
    %v139 = vsel %vm138, %v134, %v16
    %s140 = scalar_lea.vmem [#allocation13], 8
    %v141 = vpack.c.bf16 0.0, %v139
    %s143 = ssub.s32 16, 1
    %144 = vst [vmem:[%s140] sm:%s143] %v141
    %s145 = scalar_lea.vmem %s8, 3
    %s147 = sor.u32 3, 1
    %s148 = sand.u32 %s147, 1
    %v149 = vld [vmem:[%s145] sm:%s148]
    %v150 = vunpack.c.l.bf16 %v149
    %v151 = vunpack.c.h.bf16 %v149
    %v152 = vlaneseq
    %v153 = vshrl.u32 %v152, 7
    %vm155 = vcmp.lt.s32.totalorder %v153, 2
    %v156 = vsel %vm155, %v150, %v16
    %v157 = vlaneseq
    %v158 = vand.u32 %v157, 127
    %v159 = vadd.s32 %v158, 384
    %vm160 = vcmp.lt.s32.totalorder %v159, 1547
    %v161 = vsel %vm160, %v156, %v16
    %s162 = scalar_lea.vmem [#allocation13], 12
    %v163 = vpack.c.bf16 0.0, %v161
    %s165 = ssub.s32 16, 1
    %166 = vst [vmem:[%s162] sm:%s165] %v163
    %s167 = scalar_lea.vmem %s8, 4
    %s169 = sor.u32 3, 1
    %s170 = sand.u32 %s169, 1
    %v171 = vld [vmem:[%s167] sm:%s170]
    %v172 = vunpack.c.l.bf16 %v171
    %v173 = vunpack.c.h.bf16 %v171
    %v174 = vlaneseq
    %v175 = vshrl.u32 %v174, 7
    %vm177 = vcmp.lt.s32.totalorder %v175, 2
    %v178 = vsel %vm177, %v172, %v16
    %v179 = vlaneseq
    %v180 = vand.u32 %v179, 127
    %v181 = vadd.s32 %v180, 512
    %vm182 = vcmp.lt.s32.totalorder %v181, 1547
    %v183 = vsel %vm182, %v178, %v16
    %s184 = scalar_lea.vmem [#allocation13], 16
    %v185 = vpack.c.bf16 0.0, %v183
    %s187 = ssub.s32 16, 1
    %188 = vst [vmem:[%s184] sm:%s187] %v185
    %s189 = scalar_lea.vmem %s8, 5
    %s191 = sor.u32 3, 1
    %s192 = sand.u32 %s191, 1
    %v193 = vld [vmem:[%s189] sm:%s192]
    %v194 = vunpack.c.l.bf16 %v193
    %v195 = vunpack.c.h.bf16 %v193
    %v196 = vlaneseq
    %v197 = vshrl.u32 %v196, 7
    %vm199 = vcmp.lt.s32.totalorder %v197, 2
    %v200 = vsel %vm199, %v194, %v16
    %v201 = vlaneseq
    %v202 = vand.u32 %v201, 127
    %v203 = vadd.s32 %v202, 640
    %vm204 = vcmp.lt.s32.totalorder %v203, 1547
    %v205 = vsel %vm204, %v200, %v16
    %s206 = scalar_lea.vmem [#allocation13], 20
    %v207 = vpack.c.bf16 0.0, %v205
    %s209 = ssub.s32 16, 1
    %210 = vst [vmem:[%s206] sm:%s209] %v207
    %s211 = scalar_lea.vmem %s8, 6
    %s213 = sor.u32 3, 1
    %s214 = sand.u32 %s213, 1
    %v215 = vld [vmem:[%s211] sm:%s214]
    %v216 = vunpack.c.l.bf16 %v215
    %v217 = vunpack.c.h.bf16 %v215
    %v218 = vlaneseq
    %v219 = vshrl.u32 %v218, 7
    %vm221 = vcmp.lt.s32.totalorder %v219, 2
    %v222 = vsel %vm221, %v216, %v16
    %v223 = vlaneseq
    %v224 = vand.u32 %v223, 127
    %v225 = vadd.s32 %v224, 768
    %vm226 = vcmp.lt.s32.totalorder %v225, 1547
    %v227 = vsel %vm226, %v222, %v16
    %s228 = scalar_lea.vmem [#allocation13], 24
    %v229 = vpack.c.bf16 0.0, %v227
    %s231 = ssub.s32 16, 1
    %232 = vst [vmem:[%s228] sm:%s231] %v229
    %s233 = scalar_lea.vmem %s8, 7
    %s235 = sor.u32 3, 1
    %s236 = sand.u32 %s235, 1
    %v237 = vld [vmem:[%s233] sm:%s236]
    %v238 = vunpack.c.l.bf16 %v237
    %v239 = vunpack.c.h.bf16 %v237
    %v240 = vlaneseq
    %v241 = vshrl.u32 %v240, 7
    %vm243 = vcmp.lt.s32.totalorder %v241, 2
    %v244 = vsel %vm243, %v238, %v16
    %v245 = vlaneseq
    %v246 = vand.u32 %v245, 127
    %v247 = vadd.s32 %v246, 896
    %vm248 = vcmp.lt.s32.totalorder %v247, 1547
    %v249 = vsel %vm248, %v244, %v16
    %s250 = scalar_lea.vmem [#allocation13], 28
    %v251 = vpack.c.bf16 0.0, %v249
    %s253 = ssub.s32 16, 1
    %254 = vst [vmem:[%s250] sm:%s253] %v251
    %s255 = scalar_lea.vmem %s8, 8
    %s257 = sor.u32 3, 1
    %s258 = sand.u32 %s257, 1
    %v259 = vld [vmem:[%s255] sm:%s258]
    %v260 = vunpack.c.l.bf16 %v259
    %v261 = vunpack.c.h.bf16 %v259
    %v262 = vlaneseq
    %v263 = vshrl.u32 %v262, 7
    %vm265 = vcmp.lt.s32.totalorder %v263, 2
    %v266 = vsel %vm265, %v260, %v16
    %v267 = vlaneseq
    %v268 = vand.u32 %v267, 127
    %v269 = vadd.s32 %v268, 1024
    %vm270 = vcmp.lt.s32.totalorder %v269, 1547
    %v271 = vsel %vm270, %v266, %v16
    %s272 = scalar_lea.vmem [#allocation13], 32
    %v273 = vpack.c.bf16 0.0, %v271
    %s275 = ssub.s32 16, 1
    %276 = vst [vmem:[%s272] sm:%s275] %v273
    %s277 = scalar_lea.vmem %s8, 9
    %s279 = sor.u32 3, 1
    %s280 = sand.u32 %s279, 1
    %v281 = vld [vmem:[%s277] sm:%s280]
    %v282 = vunpack.c.l.bf16 %v281
    %v283 = vunpack.c.h.bf16 %v281
    %v284 = vlaneseq
    %v285 = vshrl.u32 %v284, 7
    %vm287 = vcmp.lt.s32.totalorder %v285, 2
    %v288 = vsel %vm287, %v282, %v16
    %v289 = vlaneseq
    %v290 = vand.u32 %v289, 127
    %v291 = vadd.s32 %v290, 1152
    %vm292 = vcmp.lt.s32.totalorder %v291, 1547
    %v293 = vsel %vm292, %v288, %v16
    %s294 = scalar_lea.vmem [#allocation13], 36
    %v295 = vpack.c.bf16 0.0, %v293
    %s297 = ssub.s32 16, 1
    %298 = vst [vmem:[%s294] sm:%s297] %v295
    %s299 = scalar_lea.vmem %s8, 10
    %s301 = sor.u32 3, 1
    %s302 = sand.u32 %s301, 1
    %v303 = vld [vmem:[%s299] sm:%s302]
    %v304 = vunpack.c.l.bf16 %v303
    %v305 = vunpack.c.h.bf16 %v303
    %v306 = vlaneseq
    %v307 = vshrl.u32 %v306, 7
    %vm309 = vcmp.lt.s32.totalorder %v307, 2
    %v310 = vsel %vm309, %v304, %v16
    %v311 = vlaneseq
    %v312 = vand.u32 %v311, 127
    %v313 = vadd.s32 %v312, 1280
    %vm314 = vcmp.lt.s32.totalorder %v313, 1547
    %v315 = vsel %vm314, %v310, %v16
    %s316 = scalar_lea.vmem [#allocation13], 40
    %v317 = vpack.c.bf16 0.0, %v315
    %s319 = ssub.s32 16, 1
    %320 = vst [vmem:[%s316] sm:%s319] %v317
    %s321 = scalar_lea.vmem %s8, 11
    %s323 = sor.u32 3, 1
    %s324 = sand.u32 %s323, 1
    %v325 = vld [vmem:[%s321] sm:%s324]
    %v326 = vunpack.c.l.bf16 %v325
    %v327 = vunpack.c.h.bf16 %v325
    %v328 = vlaneseq
    %v329 = vshrl.u32 %v328, 7
    %vm331 = vcmp.lt.s32.totalorder %v329, 2
    %v332 = vsel %vm331, %v326, %v16
    %v333 = vlaneseq
    %v334 = vand.u32 %v333, 127
    %v335 = vadd.s32 %v334, 1408
    %vm336 = vcmp.lt.s32.totalorder %v335, 1547
    %v337 = vsel %vm336, %v332, %v16
    %s338 = scalar_lea.vmem [#allocation13], 44
    %v339 = vpack.c.bf16 0.0, %v337
    %s341 = ssub.s32 16, 1
    %342 = vst [vmem:[%s338] sm:%s341] %v339
    %s343 = scalar_lea.vmem %s8, 12
    %s345 = sor.u32 3, 1
    %s346 = sand.u32 %s345, 1
    %v347 = vld [vmem:[%s343] sm:%s346]
    %v348 = vunpack.c.l.bf16 %v347
    %v349 = vunpack.c.h.bf16 %v347
    %v350 = vlaneseq
    %v351 = vshrl.u32 %v350, 7
    %vm353 = vcmp.lt.s32.totalorder %v351, 2
    %v354 = vsel %vm353, %v348, %v16
    %v355 = vlaneseq
    %v356 = vand.u32 %v355, 127
    %v357 = vadd.s32 %v356, 1536
    %vm358 = vcmp.lt.s32.totalorder %v357, 1547
    %v359 = vsel %vm358, %v354, %v16
    %s360 = scalar_lea.vmem [#allocation13], 48
    %v361 = vpack.c.bf16 0.0, %v359
    %s363 = ssub.s32 16, 1
    %364 = vst [vmem:[%s360] sm:%s363] %v361
    %s365 = scalar_lea.vmem [#allocation13], 52
    %v366 = vpack.c.bf16 0.0, %v16
    %s368 = ssub.s32 16, 1
    %369 = vst [vmem:[%s365] sm:%s368] %v366
    %s370 = scalar_lea.vmem [#allocation13], 56
    %v371 = vpack.c.bf16 0.0, %v16
    %s373 = ssub.s32 16, 1
    %374 = vst [vmem:[%s370] sm:%s373] %v371
    %s375 = scalar_lea.vmem [#allocation13], 60
    %v376 = vpack.c.bf16 0.0, %v16
    %s378 = ssub.s32 16, 1
    %379 = vst [vmem:[%s375] sm:%s378] %v376
    %s380 = scalar_lea.vmem [#allocation13], 64
    %v381 = vpack.c.bf16 0.0, %v16
    %s383 = ssub.s32 16, 1
    %384 = vst [vmem:[%s380] sm:%s383] %v381
    %s385 = scalar_lea.vmem [#allocation13], 68
    %v386 = vpack.c.bf16 0.0, %v16
    %s388 = ssub.s32 16, 1
    %389 = vst [vmem:[%s385] sm:%s388] %v386
    %s390 = scalar_lea.vmem [#allocation13], 72
    %v391 = vpack.c.bf16 0.0, %v16
    %s393 = ssub.s32 16, 1
    %394 = vst [vmem:[%s390] sm:%s393] %v391
    %s395 = scalar_lea.vmem [#allocation13], 76
    %v396 = vpack.c.bf16 0.0, %v16
    %s398 = ssub.s32 16, 1
    %399 = vst [vmem:[%s395] sm:%s398] %v396
    %s400 = scalar_lea.vmem [#allocation13], 80
    %v401 = vpack.c.bf16 0.0, %v16
    %s403 = ssub.s32 16, 1
    %404 = vst [vmem:[%s400] sm:%s403] %v401
    %s405 = scalar_lea.vmem [#allocation13], 84
    %v406 = vpack.c.bf16 0.0, %v16
    %s408 = ssub.s32 16, 1
    %409 = vst [vmem:[%s405] sm:%s408] %v406
    %s410 = scalar_lea.vmem [#allocation13], 88
    %v411 = vpack.c.bf16 0.0, %v16
    %s413 = ssub.s32 16, 1
    %414 = vst [vmem:[%s410] sm:%s413] %v411
    %s415 = scalar_lea.vmem [#allocation13], 92
    %v416 = vpack.c.bf16 0.0, %v16
    %s418 = ssub.s32 16, 1
    %419 = vst [vmem:[%s415] sm:%s418] %v416
    %s420 = scalar_lea.vmem [#allocation13], 96
    %v421 = vpack.c.bf16 0.0, %v16
    %s423 = ssub.s32 16, 1
    %424 = vst [vmem:[%s420] sm:%s423] %v421
    %s425 = scalar_lea.vmem [#allocation13], 100
    %v426 = vpack.c.bf16 0.0, %v16
    %s428 = ssub.s32 16, 1
    %429 = vst [vmem:[%s425] sm:%s428] %v426
    %v431 = vld [vmem:[#allocation13] sm:$0xff]
    %v432 = vld [vmem:[#allocation13 + $0x8] sm:$0xff]
    %v433 = vld [vmem:[#allocation13 + $0x10] sm:$0xff]
    %v434 = vld [vmem:[#allocation13 + $0x18] sm:$0xff]
    %v435 = vld [vmem:[#allocation13 + $0x20] sm:$0xff]
    %v436 = vld [vmem:[#allocation13 + $0x28] sm:$0xff]
    %v437 = vld [vmem:[#allocation13 + $0x30] sm:$0xf]
    %v438 = vld [vmem:[#allocation13 + $0x34] sm:$0xff]
    %v439 = vld [vmem:[#allocation13 + $0x3c] sm:$0xff]
    %v440 = vld [vmem:[#allocation13 + $0x44] sm:$0xff]
    %v441 = vld [vmem:[#allocation13 + $0x4c] sm:$0xff]
    %v442 = vld [vmem:[#allocation13 + $0x54] sm:$0xff]
    %v443 = vld [vmem:[#allocation13 + $0x5c] sm:$0xff]
    %v444 = vld [vmem:[#allocation13 + $0x64] sm:$0xf]
    %v445 = vld [vmem:[#allocation8] sm:$0xff]
    %v446 = vld [vmem:[#allocation8 + $0x8] sm:$0xff]
    %v447 = vld [vmem:[#allocation8 + $0x10] sm:$0xff]
    %v448 = vld [vmem:[#allocation8 + $0x18] sm:$0xff]
    %v449 = vld [vmem:[#allocation8 + $0x20] sm:$0xff]
    %v450 = vld [vmem:[#allocation8 + $0x28] sm:$0xff]
    %v451 = vld [vmem:[#allocation8 + $0x30] sm:$0xff]
    %v452 = vld [vmem:[#allocation8 + $0x38] sm:$0xff]
    %v453 = vld [vmem:[#allocation8 + $0x40] sm:$0xff]
    %v454 = vld [vmem:[#allocation8 + $0x48] sm:$0xff]
    %v455 = vld [vmem:[#allocation8 + $0x50] sm:$0xff]
    %v456 = vld [vmem:[#allocation8 + $0x58] sm:$0xff]
    %v457 = vld [vmem:[#allocation8 + $0x60] sm:$0xff]
    %v458 = vld [vmem:[#allocation8 + $0x68] sm:$0xff]
    %v459 = vld [vmem:[#allocation8 + $0x70] sm:$0xff]
    %v460 = vld [vmem:[#allocation8 + $0x78] sm:$0xff]
    %v461 = vld [vmem:[#allocation8 + $0x80] sm:$0xff]
    %v462 = vld [vmem:[#allocation8 + $0x88] sm:$0xff]
    %v463 = vld [vmem:[#allocation8 + $0x90] sm:$0xff]
    %v464 = vld [vmem:[#allocation8 + $0x98] sm:$0xff]
    %v465 = vld [vmem:[#allocation8 + $0xa0] sm:$0xff]
    %v466 = vld [vmem:[#allocation8 + $0xa8] sm:$0xff]
    %v467 = vld [vmem:[#allocation8 + $0xb0] sm:$0xff]
    %v468 = vld [vmem:[#allocation8 + $0xb8] sm:$0xff]
    %v469 = vld [vmem:[#allocation8 + $0xc0] sm:$0xff]
    %v470 = vld [vmem:[#allocation8 + $0xc8] sm:$0xff]
    %v471 = vld [vmem:[#allocation8 + $0xd0] sm:$0xff]
    %v472 = vld [vmem:[#allocation8 + $0xd8] sm:$0xff]
    %v473 = vld [vmem:[#allocation8 + $0xe0] sm:$0xff]
    %v474 = vld [vmem:[#allocation8 + $0xe8] sm:$0xff]
    %v475 = vld [vmem:[#allocation8 + $0xf0] sm:$0xff]
    %v476 = vld [vmem:[#allocation8 + $0xf8] sm:$0xff]
    %v477 = vld [vmem:[#allocation8 + $0x100] sm:$0xff]
    %v478 = vld [vmem:[#allocation8 + $0x108] sm:$0xff]
    %v479 = vld [vmem:[#allocation8 + $0x110] sm:$0xff]
    %v480 = vld [vmem:[#allocation8 + $0x118] sm:$0xff]
    %v481 = vld [vmem:[#allocation8 + $0x120] sm:$0xff]
    %v482 = vld [vmem:[#allocation8 + $0x128] sm:$0xff]
    %v483 = vld [vmem:[#allocation8 + $0x130] sm:$0xff]
    %v484 = vld [vmem:[#allocation8 + $0x138] sm:$0xff]
    %v485 = vld [vmem:[#allocation8 + $0x140] sm:$0xff]
    %v486 = vld [vmem:[#allocation8 + $0x148] sm:$0xff]
    %v487 = vld [vmem:[#allocation8 + $0x150] sm:$0xff]
    %v488 = vld [vmem:[#allocation8 + $0x158] sm:$0xff]
    %v489 = vld [vmem:[#allocation8 + $0x160] sm:$0xff]
    %v490 = vld [vmem:[#allocation8 + $0x168] sm:$0xff]
    %v491 = vld [vmem:[#allocation8 + $0x170] sm:$0xff]
    %v492 = vld [vmem:[#allocation8 + $0x178] sm:$0xff]
    %v493 = vld [vmem:[#allocation8 + $0x180] sm:$0xff]
    %v494 = vld [vmem:[#allocation8 + $0x188] sm:$0xff]
    %v495 = vld [vmem:[#allocation8 + $0x190] sm:$0xff]
    %v496 = vld [vmem:[#allocation8 + $0x198] sm:$0xff]
    %v497 = vld [vmem:[#allocation8 + $0x1a0] sm:$0xff]
    %v498 = vld [vmem:[#allocation8 + $0x1a8] sm:$0xff]
    %v499 = vld [vmem:[#allocation8 + $0x1b0] sm:$0xff]
    %v500 = vld [vmem:[#allocation8 + $0x1b8] sm:$0xff]
    %v501 = vld [vmem:[#allocation8 + $0x1c0] sm:$0xff]
    %v502 = vld [vmem:[#allocation8 + $0x1c8] sm:$0xff]
    %v503 = vld [vmem:[#allocation8 + $0x1d0] sm:$0xff]
    %v504 = vld [vmem:[#allocation8 + $0x1d8] sm:$0xff]
    %v505 = vld [vmem:[#allocation8 + $0x1e0] sm:$0xff]
    %v506 = vld [vmem:[#allocation8 + $0x1e8] sm:$0xff]
    %v507 = vld [vmem:[#allocation8 + $0x1f0] sm:$0xff]
    %v508 = vld [vmem:[#allocation8 + $0x1f8] sm:$0xff]
    %v509 = vld [vmem:[#allocation8 + $0x200] sm:$0xff]
    %v510 = vld [vmem:[#allocation8 + $0x208] sm:$0xff]
    %v511 = vld [vmem:[#allocation8 + $0x210] sm:$0xff]
    %v512 = vld [vmem:[#allocation8 + $0x218] sm:$0xff]
    %v513 = vld [vmem:[#allocation8 + $0x220] sm:$0xff]
    %v514 = vld [vmem:[#allocation8 + $0x228] sm:$0xff]
    %v515 = vld [vmem:[#allocation8 + $0x230] sm:$0xff]
    %v516 = vld [vmem:[#allocation8 + $0x238] sm:$0xff]
    %v517 = vld [vmem:[#allocation8 + $0x240] sm:$0xff]
    %v518 = vld [vmem:[#allocation8 + $0x248] sm:$0xff]
    %v519 = vld [vmem:[#allocation8 + $0x250] sm:$0xff]
    %v520 = vld [vmem:[#allocation8 + $0x258] sm:$0xff]
    %v521 = vld [vmem:[#allocation8 + $0x260] sm:$0xff]
    %v522 = vld [vmem:[#allocation8 + $0x268] sm:$0xff]
    %v523 = vld [vmem:[#allocation8 + $0x270] sm:$0xff]
    %v524 = vld [vmem:[#allocation8 + $0x278] sm:$0xff]
    %v525 = vld [vmem:[#allocation8 + $0x280] sm:$0xff]
    %v526 = vld [vmem:[#allocation8 + $0x288] sm:$0xff]
    %v527 = vld [vmem:[#allocation8 + $0x290] sm:$0xff]
    %v528 = vld [vmem:[#allocation8 + $0x298] sm:$0xff]
    %v529 = vld [vmem:[#allocation8 + $0x2a0] sm:$0xff]
    %v530 = vld [vmem:[#allocation8 + $0x2a8] sm:$0xff]
    %v531 = vld [vmem:[#allocation8 + $0x2b0] sm:$0xff]
    %v532 = vld [vmem:[#allocation8 + $0x2b8] sm:$0xff]
    %v533 = vld [vmem:[#allocation8 + $0x2c0] sm:$0xff]
    %v534 = vld [vmem:[#allocation8 + $0x2c8] sm:$0xff]
    %v535 = vld [vmem:[#allocation8 + $0x2d0] sm:$0xff]
    %v536 = vld [vmem:[#allocation8 + $0x2d8] sm:$0xff]
    %v537 = vld [vmem:[#allocation8 + $0x2e0] sm:$0xff]
    %v538 = vld [vmem:[#allocation8 + $0x2e8] sm:$0xff]
    %v539 = vld [vmem:[#allocation8 + $0x2f0] sm:$0xff]
    %v540 = vld [vmem:[#allocation8 + $0x2f8] sm:$0xff]
    %v541 = vld [vmem:[#allocation8 + $0x300] sm:$0xff]
    %v542 = vld [vmem:[#allocation8 + $0x308] sm:$0xff]
    %v543 = vld [vmem:[#allocation8 + $0x310] sm:$0xff]
    %v544 = vld [vmem:[#allocation8 + $0x318] sm:$0xff]
    %v545 = vld [vmem:[#allocation8 + $0x320] sm:$0xff]
    %v546 = vld [vmem:[#allocation8 + $0x328] sm:$0xff]
    %v547 = vld [vmem:[#allocation8 + $0x330] sm:$0xff]
    %v548 = vld [vmem:[#allocation8 + $0x338] sm:$0xff]
    %v549 = vld [vmem:[#allocation8 + $0x340] sm:$0xff]
    %v550 = vld [vmem:[#allocation8 + $0x348] sm:$0xff]
    %v551 = vld [vmem:[#allocation8 + $0x350] sm:$0xff]
    %v552 = vld [vmem:[#allocation8 + $0x358] sm:$0xff]
    %v553 = vld [vmem:[#allocation8 + $0x360] sm:$0xff]
    %v554 = vld [vmem:[#allocation8 + $0x368] sm:$0xff]
    %v555 = vld [vmem:[#allocation8 + $0x370] sm:$0xff]
    %v556 = vld [vmem:[#allocation8 + $0x378] sm:$0xff]
    %v557 = vld [vmem:[#allocation8 + $0x380] sm:$0xff]
    %v558 = vld [vmem:[#allocation8 + $0x388] sm:$0xff]
    %v559 = vld [vmem:[#allocation8 + $0x390] sm:$0xff]
    %v560 = vld [vmem:[#allocation8 + $0x398] sm:$0xff]
    %v561 = vld [vmem:[#allocation8 + $0x3a0] sm:$0xff]
    %v562 = vld [vmem:[#allocation8 + $0x3a8] sm:$0xff]
    %v563 = vld [vmem:[#allocation8 + $0x3b0] sm:$0xff]
    %v564 = vld [vmem:[#allocation8 + $0x3b8] sm:$0xff]
    %v565 = vld [vmem:[#allocation8 + $0x3c0] sm:$0xff]
    %v566 = vld [vmem:[#allocation8 + $0x3c8] sm:$0xff]
    %v567 = vld [vmem:[#allocation8 + $0x3d0] sm:$0xff]
    %v568 = vld [vmem:[#allocation8 + $0x3d8] sm:$0xff]
    %v569 = vld [vmem:[#allocation8 + $0x3e0] sm:$0xff]
    %v570 = vld [vmem:[#allocation8 + $0x3e8] sm:$0xff]
    %v571 = vld [vmem:[#allocation8 + $0x3f0] sm:$0xff]
    %v572 = vld [vmem:[#allocation8 + $0x3f8] sm:$0xff]
    %v573 = vld [vmem:[#allocation8 + $0x400] sm:$0xff]
    %v574 = vld [vmem:[#allocation8 + $0x408] sm:$0xff]
    %v575 = vld [vmem:[#allocation8 + $0x410] sm:$0xff]
    %v576 = vld [vmem:[#allocation8 + $0x418] sm:$0xff]
    %v577 = vld [vmem:[#allocation8 + $0x420] sm:$0xff]
    %v578 = vld [vmem:[#allocation8 + $0x428] sm:$0xff]
    %v579 = vld [vmem:[#allocation8 + $0x430] sm:$0xff]
    %v580 = vld [vmem:[#allocation8 + $0x438] sm:$0xff]
    %v581 = vld [vmem:[#allocation8 + $0x440] sm:$0xff]
    %v582 = vld [vmem:[#allocation8 + $0x448] sm:$0xff]
    %v583 = vld [vmem:[#allocation8 + $0x450] sm:$0xff]
    %v584 = vld [vmem:[#allocation8 + $0x458] sm:$0xff]
    %v585 = vld [vmem:[#allocation8 + $0x460] sm:$0xff]
    %v586 = vld [vmem:[#allocation8 + $0x468] sm:$0xff]
    %v587 = vld [vmem:[#allocation8 + $0x470] sm:$0xff]
    %v588 = vld [vmem:[#allocation8 + $0x478] sm:$0xff]
    %v589 = vld [vmem:[#allocation8 + $0x480] sm:$0xff]
    %v590 = vld [vmem:[#allocation8 + $0x488] sm:$0xff]
    %v591 = vld [vmem:[#allocation8 + $0x490] sm:$0xff]
    %v592 = vld [vmem:[#allocation8 + $0x498] sm:$0xff]
    %v593 = vld [vmem:[#allocation8 + $0x4a0] sm:$0xff]
    %v594 = vld [vmem:[#allocation8 + $0x4a8] sm:$0xff]
    %v595 = vld [vmem:[#allocation8 + $0x4b0] sm:$0xff]
    %v596 = vld [vmem:[#allocation8 + $0x4b8] sm:$0xff]
    %v597 = vld [vmem:[#allocation8 + $0x4c0] sm:$0xff]
    %v598 = vld [vmem:[#allocation8 + $0x4c8] sm:$0xff]
    %v599 = vld [vmem:[#allocation8 + $0x4d0] sm:$0xff]
    %v600 = vld [vmem:[#allocation8 + $0x4d8] sm:$0xff]
    %v601 = vld [vmem:[#allocation8 + $0x4e0] sm:$0xff]
    %v602 = vld [vmem:[#allocation8 + $0x4e8] sm:$0xff]
    %v603 = vld [vmem:[#allocation8 + $0x4f0] sm:$0xff]
    %v604 = vld [vmem:[#allocation8 + $0x4f8] sm:$0xff]
    %v605 = vld [vmem:[#allocation8 + $0x500] sm:$0xff]
    %v606 = vld [vmem:[#allocation8 + $0x508] sm:$0xff]
    %v607 = vld [vmem:[#allocation8 + $0x510] sm:$0xff]
    %v608 = vld [vmem:[#allocation8 + $0x518] sm:$0xff]
    %v609 = vld [vmem:[#allocation8 + $0x520] sm:$0xff]
    %v610 = vld [vmem:[#allocation8 + $0x528] sm:$0xff]
    %v611 = vld [vmem:[#allocation8 + $0x530] sm:$0xff]
    %v612 = vld [vmem:[#allocation8 + $0x538] sm:$0xff]
    %v613 = vld [vmem:[#allocation8 + $0x540] sm:$0xff]
    %v614 = vld [vmem:[#allocation8 + $0x548] sm:$0xff]
    %v615 = vld [vmem:[#allocation8 + $0x550] sm:$0xff]
    %v616 = vld [vmem:[#allocation8 + $0x558] sm:$0xff]
    %v617 = vld [vmem:[#allocation8 + $0x560] sm:$0xff]
    %v618 = vld [vmem:[#allocation8 + $0x568] sm:$0xff]
    %v619 = vld [vmem:[#allocation8 + $0x570] sm:$0xff]
    %v620 = vld [vmem:[#allocation8 + $0x578] sm:$0xff]
    %v621 = vld [vmem:[#allocation8 + $0x580] sm:$0xff]
    %v622 = vld [vmem:[#allocation8 + $0x588] sm:$0xff]
    %v623 = vld [vmem:[#allocation8 + $0x590] sm:$0xff]
    %v624 = vld [vmem:[#allocation8 + $0x598] sm:$0xff]
    %v625 = vld [vmem:[#allocation8 + $0x5a0] sm:$0xff]
    %v626 = vld [vmem:[#allocation8 + $0x5a8] sm:$0xff]
    %v627 = vld [vmem:[#allocation8 + $0x5b0] sm:$0xff]
    %v628 = vld [vmem:[#allocation8 + $0x5b8] sm:$0xff]
    %v629 = vld [vmem:[#allocation8 + $0x5c0] sm:$0xff]
    %v630 = vld [vmem:[#allocation8 + $0x5c8] sm:$0xff]
    %v631 = vld [vmem:[#allocation8 + $0x5d0] sm:$0xff]
    %v632 = vld [vmem:[#allocation8 + $0x5d8] sm:$0xff]
    %v633 = vld [vmem:[#allocation8 + $0x5e0] sm:$0xff]
    %v634 = vld [vmem:[#allocation8 + $0x5e8] sm:$0xff]
    %v635 = vld [vmem:[#allocation8 + $0x5f0] sm:$0xff]
    %v636 = vld [vmem:[#allocation8 + $0x5f8] sm:$0xff]
    %v637 = vld [vmem:[#allocation8 + $0x600] sm:$0xff]
    %v638 = vld [vmem:[#allocation8 + $0x608] sm:$0xff]
    %v639 = vld [vmem:[#allocation8 + $0x610] sm:$0xff]
    %v640 = vld [vmem:[#allocation8 + $0x618] sm:$0xff]
    %v641 = vld [vmem:[#allocation8 + $0x620] sm:$0xff]
    %v642 = vld [vmem:[#allocation8 + $0x628] sm:$0xff]
    %v643 = vld [vmem:[#allocation8 + $0x630] sm:$0xff]
    %v644 = vld [vmem:[#allocation8 + $0x638] sm:$0xff]
    %v645 = vld [vmem:[#allocation8 + $0x640] sm:$0xff]
    %v646 = vld [vmem:[#allocation8 + $0x648] sm:$0xff]
    %v647 = vld [vmem:[#allocation8 + $0x650] sm:$0xff]
    %v648 = vld [vmem:[#allocation8 + $0x658] sm:$0xff]
    %v649 = vld [vmem:[#allocation8 + $0x660] sm:$0xff]
    %v650 = vld [vmem:[#allocation8 + $0x668] sm:$0xff]
    %v651 = vld [vmem:[#allocation8 + $0x670] sm:$0xff]
    %v652 = vld [vmem:[#allocation8 + $0x678] sm:$0xff]
    %v653 = vld [vmem:[%s1] sm:$0x3]
    %v655 = vlaneseq
    %v656 = vshrl.u32 %v655, 7
    %v657 = vsub.s32 0, %v656
    %v658 = vrot.slane %v653, %v657
    %v659 = vlaneseq
    %v660 = vshrl.u32 %v659, 7
    %v661 = vsub.s32 1, %v660
    %v662 = vrot.slane %v653, %v661
    %v679 = vunpack.c.l.b16 %v431
    %v680 = vunpack.c.h.b16 %v431
    %v681 = vunpack.c.l.b16 %v432
    %v682 = vunpack.c.h.b16 %v432
    %v683 = vunpack.c.l.b16 %v433
    %v684 = vunpack.c.h.b16 %v433
    %v685 = vunpack.c.l.b16 %v434
    %v686 = vunpack.c.h.b16 %v434
    %v687 = vunpack.c.l.b16 %v435
    %v688 = vunpack.c.h.b16 %v435
    %v689 = vunpack.c.l.b16 %v436
    %v690 = vunpack.c.h.b16 %v436
    %v691 = vunpack.c.l.b16 %v437
    %v692 = vunpack.c.l.b16 %v438
    %v693 = vunpack.c.h.b16 %v438
    %v694 = vunpack.c.l.b16 %v439
    %v695 = vunpack.c.h.b16 %v439
    %v696 = vunpack.c.l.b16 %v440
    %v697 = vunpack.c.h.b16 %v440
    %v698 = vunpack.c.l.b16 %v441
    %v699 = vunpack.c.h.b16 %v441
    %v700 = vunpack.c.l.b16 %v442
    %v701 = vunpack.c.h.b16 %v442
    %v702 = vunpack.c.l.b16 %v443
    %v703 = vunpack.c.h.b16 %v443
    %v704 = vunpack.c.l.b16 %v444
    %v705 = vpack.c.b16 %v692, %v679
    %v706 = vpack.c.b16 %v693, %v680
    %v707 = vpack.c.b16 %v694, %v681
    %v708 = vpack.c.b16 %v695, %v682
    %v709 = vpack.c.b16 %v696, %v683
    %v710 = vpack.c.b16 %v697, %v684
    %v711 = vpack.c.b16 %v698, %v685
    %v712 = vpack.c.b16 %v699, %v686
    %v713 = vpack.c.b16 %v700, %v687
    %v714 = vpack.c.b16 %v701, %v688
    %v715 = vpack.c.b16 %v702, %v689
    %v716 = vpack.c.b16 %v703, %v690
    %v717 = vpack.c.b16 %v704, %v691
    %v939 = vunpack.c.l.b16 %v445
    %v940 = vunpack.c.h.b16 %v445
    %v941 = vunpack.c.l.b16 %v446
    %v942 = vunpack.c.h.b16 %v446
    %v943 = vunpack.c.l.b16 %v447
    %v944 = vunpack.c.h.b16 %v447
    %v945 = vunpack.c.l.b16 %v448
    %v946 = vunpack.c.h.b16 %v448
    %v947 = vunpack.c.l.b16 %v449
    %v948 = vunpack.c.h.b16 %v449
    %v949 = vunpack.c.l.b16 %v450
    %v950 = vunpack.c.h.b16 %v450
    %v951 = vunpack.c.l.b16 %v451
    %v952 = vunpack.c.h.b16 %v451
    %v953 = vunpack.c.l.b16 %v452
    %v954 = vunpack.c.h.b16 %v452
    %v955 = vunpack.c.l.b16 %v453
    %v956 = vunpack.c.h.b16 %v453
    %v957 = vunpack.c.l.b16 %v454
    %v958 = vunpack.c.h.b16 %v454
    %v959 = vunpack.c.l.b16 %v455
    %v960 = vunpack.c.h.b16 %v455
    %v961 = vunpack.c.l.b16 %v456
    %v962 = vunpack.c.h.b16 %v456
    %v963 = vunpack.c.l.b16 %v457
    %v964 = vunpack.c.h.b16 %v457
    %v965 = vunpack.c.l.b16 %v458
    %v966 = vunpack.c.h.b16 %v458
    %v967 = vunpack.c.l.b16 %v459
    %v968 = vunpack.c.h.b16 %v459
    %v969 = vunpack.c.l.b16 %v460
    %v970 = vunpack.c.h.b16 %v460
    %v971 = vunpack.c.l.b16 %v461
    %v972 = vunpack.c.h.b16 %v461
    %v973 = vunpack.c.l.b16 %v462
    %v974 = vunpack.c.h.b16 %v462
    %v975 = vunpack.c.l.b16 %v463
    %v976 = vunpack.c.h.b16 %v463
    %v977 = vunpack.c.l.b16 %v464
    %v978 = vunpack.c.h.b16 %v464
    %v979 = vunpack.c.l.b16 %v465
    %v980 = vunpack.c.h.b16 %v465
    %v981 = vunpack.c.l.b16 %v466
    %v982 = vunpack.c.h.b16 %v466
    %v983 = vunpack.c.l.b16 %v467
    %v984 = vunpack.c.h.b16 %v467
    %v985 = vunpack.c.l.b16 %v468
    %v986 = vunpack.c.h.b16 %v468
    %v987 = vunpack.c.l.b16 %v469
    %v988 = vunpack.c.h.b16 %v469
    %v989 = vunpack.c.l.b16 %v470
    %v990 = vunpack.c.h.b16 %v470
    %v991 = vunpack.c.l.b16 %v471
    %v992 = vunpack.c.h.b16 %v471
    %v993 = vunpack.c.l.b16 %v472
    %v994 = vunpack.c.h.b16 %v472
    %v995 = vunpack.c.l.b16 %v473
    %v996 = vunpack.c.h.b16 %v473
    %v997 = vunpack.c.l.b16 %v474
    %v998 = vunpack.c.h.b16 %v474
    %v999 = vunpack.c.l.b16 %v475
    %v1000 = vunpack.c.h.b16 %v475
    %v1001 = vunpack.c.l.b16 %v476
    %v1002 = vunpack.c.h.b16 %v476
    %v1003 = vunpack.c.l.b16 %v477
    %v1004 = vunpack.c.h.b16 %v477
    %v1005 = vunpack.c.l.b16 %v478
    %v1006 = vunpack.c.h.b16 %v478
    %v1007 = vunpack.c.l.b16 %v479
    %v1008 = vunpack.c.h.b16 %v479
    %v1009 = vunpack.c.l.b16 %v480
    %v1010 = vunpack.c.h.b16 %v480
    %v1011 = vunpack.c.l.b16 %v481
    %v1012 = vunpack.c.h.b16 %v481
    %v1013 = vunpack.c.l.b16 %v482
    %v1014 = vunpack.c.h.b16 %v482
    %v1015 = vunpack.c.l.b16 %v483
    %v1016 = vunpack.c.h.b16 %v483
    %v1017 = vunpack.c.l.b16 %v484
    %v1018 = vunpack.c.h.b16 %v484
    %v1019 = vunpack.c.l.b16 %v485
    %v1020 = vunpack.c.h.b16 %v485
    %v1021 = vunpack.c.l.b16 %v486
    %v1022 = vunpack.c.h.b16 %v486
    %v1023 = vunpack.c.l.b16 %v487
    %v1024 = vunpack.c.h.b16 %v487
    %v1025 = vunpack.c.l.b16 %v488
    %v1026 = vunpack.c.h.b16 %v488
    %v1027 = vunpack.c.l.b16 %v489
    %v1028 = vunpack.c.h.b16 %v489
    %v1029 = vunpack.c.l.b16 %v490
    %v1030 = vunpack.c.h.b16 %v490
    %v1031 = vunpack.c.l.b16 %v491
    %v1032 = vunpack.c.h.b16 %v491
    %v1033 = vunpack.c.l.b16 %v492
    %v1034 = vunpack.c.h.b16 %v492
    %v1035 = vunpack.c.l.b16 %v493
    %v1036 = vunpack.c.h.b16 %v493
    %v1037 = vunpack.c.l.b16 %v494
    %v1038 = vunpack.c.h.b16 %v494
    %v1039 = vunpack.c.l.b16 %v495
    %v1040 = vunpack.c.h.b16 %v495
    %v1041 = vunpack.c.l.b16 %v496
    %v1042 = vunpack.c.h.b16 %v496
    %v1043 = vunpack.c.l.b16 %v497
    %v1044 = vunpack.c.h.b16 %v497
    %v1045 = vunpack.c.l.b16 %v498
    %v1046 = vunpack.c.h.b16 %v498
    %v1047 = vunpack.c.l.b16 %v499
    %v1048 = vunpack.c.h.b16 %v499
    %v1049 = vunpack.c.l.b16 %v500
    %v1050 = vunpack.c.h.b16 %v500
    %v1051 = vunpack.c.l.b16 %v501
    %v1052 = vunpack.c.h.b16 %v501
    %v1053 = vunpack.c.l.b16 %v502
    %v1054 = vunpack.c.h.b16 %v502
    %v1055 = vunpack.c.l.b16 %v503
    %v1056 = vunpack.c.h.b16 %v503
    %v1057 = vunpack.c.l.b16 %v504
    %v1058 = vunpack.c.h.b16 %v504
    %v1059 = vunpack.c.l.b16 %v505
    %v1060 = vunpack.c.h.b16 %v505
    %v1061 = vunpack.c.l.b16 %v506
    %v1062 = vunpack.c.h.b16 %v506
    %v1063 = vunpack.c.l.b16 %v507
    %v1064 = vunpack.c.h.b16 %v507
    %v1065 = vunpack.c.l.b16 %v508
    %v1066 = vunpack.c.h.b16 %v508
    %v1067 = vunpack.c.l.b16 %v509
    %v1068 = vunpack.c.h.b16 %v509
    %v1069 = vunpack.c.l.b16 %v510
    %v1070 = vunpack.c.h.b16 %v510
    %v1071 = vunpack.c.l.b16 %v511
    %v1072 = vunpack.c.h.b16 %v511
    %v1073 = vunpack.c.l.b16 %v512
    %v1074 = vunpack.c.h.b16 %v512
    %v1075 = vunpack.c.l.b16 %v513
    %v1076 = vunpack.c.h.b16 %v513
    %v1077 = vunpack.c.l.b16 %v514
    %v1078 = vunpack.c.h.b16 %v514
    %v1079 = vunpack.c.l.b16 %v515
    %v1080 = vunpack.c.h.b16 %v515
    %v1081 = vunpack.c.l.b16 %v516
    %v1082 = vunpack.c.h.b16 %v516
    %v1083 = vunpack.c.l.b16 %v517
    %v1084 = vunpack.c.h.b16 %v517
    %v1085 = vunpack.c.l.b16 %v518
    %v1086 = vunpack.c.h.b16 %v518
    %v1087 = vunpack.c.l.b16 %v519
    %v1088 = vunpack.c.h.b16 %v519
    %v1089 = vunpack.c.l.b16 %v520
    %v1090 = vunpack.c.h.b16 %v520
    %v1091 = vunpack.c.l.b16 %v521
    %v1092 = vunpack.c.h.b16 %v521
    %v1093 = vunpack.c.l.b16 %v522
    %v1094 = vunpack.c.h.b16 %v522
    %v1095 = vunpack.c.l.b16 %v523
    %v1096 = vunpack.c.h.b16 %v523
    %v1097 = vunpack.c.l.b16 %v524
    %v1098 = vunpack.c.h.b16 %v524
    %v1099 = vunpack.c.l.b16 %v525
    %v1100 = vunpack.c.h.b16 %v525
    %v1101 = vunpack.c.l.b16 %v526
    %v1102 = vunpack.c.h.b16 %v526
    %v1103 = vunpack.c.l.b16 %v527
    %v1104 = vunpack.c.h.b16 %v527
    %v1105 = vunpack.c.l.b16 %v528
    %v1106 = vunpack.c.h.b16 %v528
    %v1107 = vunpack.c.l.b16 %v529
    %v1108 = vunpack.c.h.b16 %v529
    %v1109 = vunpack.c.l.b16 %v530
    %v1110 = vunpack.c.h.b16 %v530
    %v1111 = vunpack.c.l.b16 %v531
    %v1112 = vunpack.c.h.b16 %v531
    %v1113 = vunpack.c.l.b16 %v532
    %v1114 = vunpack.c.h.b16 %v532
    %v1115 = vunpack.c.l.b16 %v533
    %v1116 = vunpack.c.h.b16 %v533
    %v1117 = vunpack.c.l.b16 %v534
    %v1118 = vunpack.c.h.b16 %v534
    %v1119 = vunpack.c.l.b16 %v535
    %v1120 = vunpack.c.h.b16 %v535
    %v1121 = vunpack.c.l.b16 %v536
    %v1122 = vunpack.c.h.b16 %v536
    %v1123 = vunpack.c.l.b16 %v537
    %v1124 = vunpack.c.h.b16 %v537
    %v1125 = vunpack.c.l.b16 %v538
    %v1126 = vunpack.c.h.b16 %v538
    %v1127 = vunpack.c.l.b16 %v539
    %v1128 = vunpack.c.h.b16 %v539
    %v1129 = vunpack.c.l.b16 %v540
    %v1130 = vunpack.c.h.b16 %v540
    %v1131 = vunpack.c.l.b16 %v541
    %v1132 = vunpack.c.h.b16 %v541
    %v1133 = vunpack.c.l.b16 %v542
    %v1134 = vunpack.c.h.b16 %v542
    %v1135 = vunpack.c.l.b16 %v543
    %v1136 = vunpack.c.h.b16 %v543
    %v1137 = vunpack.c.l.b16 %v544
    %v1138 = vunpack.c.h.b16 %v544
    %v1139 = vunpack.c.l.b16 %v545
    %v1140 = vunpack.c.h.b16 %v545
    %v1141 = vunpack.c.l.b16 %v546
    %v1142 = vunpack.c.h.b16 %v546
    %v1143 = vunpack.c.l.b16 %v547
    %v1144 = vunpack.c.h.b16 %v547
    %v1145 = vunpack.c.l.b16 %v548
    %v1146 = vunpack.c.h.b16 %v548
    %v1147 = vunpack.c.l.b16 %v549
    %v1148 = vunpack.c.h.b16 %v549
    %v1149 = vunpack.c.l.b16 %v550
    %v1150 = vunpack.c.h.b16 %v550
    %v1151 = vunpack.c.l.b16 %v551
    %v1152 = vunpack.c.h.b16 %v551
    %v1153 = vunpack.c.l.b16 %v552
    %v1154 = vunpack.c.h.b16 %v552
    %v1155 = vunpack.c.l.b16 %v553
    %v1156 = vunpack.c.h.b16 %v553
    %v1157 = vunpack.c.l.b16 %v554
    %v1158 = vunpack.c.h.b16 %v554
    %v1159 = vunpack.c.l.b16 %v555
    %v1160 = vunpack.c.h.b16 %v555
    %v1161 = vunpack.c.l.b16 %v556
    %v1162 = vunpack.c.h.b16 %v556
    %v1163 = vunpack.c.l.b16 %v557
    %v1164 = vunpack.c.h.b16 %v557
    %v1165 = vunpack.c.l.b16 %v558
    %v1166 = vunpack.c.h.b16 %v558
    %v1167 = vunpack.c.l.b16 %v559
    %v1168 = vunpack.c.h.b16 %v559
    %v1169 = vunpack.c.l.b16 %v560
    %v1170 = vunpack.c.h.b16 %v560
    %v1171 = vunpack.c.l.b16 %v561
    %v1172 = vunpack.c.h.b16 %v561
    %v1173 = vunpack.c.l.b16 %v562
    %v1174 = vunpack.c.h.b16 %v562
    %v1175 = vunpack.c.l.b16 %v563
    %v1176 = vunpack.c.h.b16 %v563
    %v1177 = vunpack.c.l.b16 %v564
    %v1178 = vunpack.c.h.b16 %v564
    %v1179 = vunpack.c.l.b16 %v565
    %v1180 = vunpack.c.h.b16 %v565
    %v1181 = vunpack.c.l.b16 %v566
    %v1182 = vunpack.c.h.b16 %v566
    %v1183 = vunpack.c.l.b16 %v567
    %v1184 = vunpack.c.h.b16 %v567
    %v1185 = vunpack.c.l.b16 %v568
    %v1186 = vunpack.c.h.b16 %v568
    %v1187 = vunpack.c.l.b16 %v569
    %v1188 = vunpack.c.h.b16 %v569
    %v1189 = vunpack.c.l.b16 %v570
    %v1190 = vunpack.c.h.b16 %v570
    %v1191 = vunpack.c.l.b16 %v571
    %v1192 = vunpack.c.h.b16 %v571
    %v1193 = vunpack.c.l.b16 %v572
    %v1194 = vunpack.c.h.b16 %v572
    %v1195 = vunpack.c.l.b16 %v573
    %v1196 = vunpack.c.h.b16 %v573
    %v1197 = vunpack.c.l.b16 %v574
    %v1198 = vunpack.c.h.b16 %v574
    %v1199 = vunpack.c.l.b16 %v575
    %v1200 = vunpack.c.h.b16 %v575
    %v1201 = vunpack.c.l.b16 %v576
    %v1202 = vunpack.c.h.b16 %v576
    %v1203 = vunpack.c.l.b16 %v577
    %v1204 = vunpack.c.h.b16 %v577
    %v1205 = vunpack.c.l.b16 %v578
    %v1206 = vunpack.c.h.b16 %v578
    %v1207 = vunpack.c.l.b16 %v579
    %v1208 = vunpack.c.h.b16 %v579
    %v1209 = vunpack.c.l.b16 %v580
    %v1210 = vunpack.c.h.b16 %v580
    %v1211 = vunpack.c.l.b16 %v581
    %v1212 = vunpack.c.h.b16 %v581
    %v1213 = vunpack.c.l.b16 %v582
    %v1214 = vunpack.c.h.b16 %v582
    %v1215 = vunpack.c.l.b16 %v583
    %v1216 = vunpack.c.h.b16 %v583
    %v1217 = vunpack.c.l.b16 %v584
    %v1218 = vunpack.c.h.b16 %v584
    %v1219 = vunpack.c.l.b16 %v585
    %v1220 = vunpack.c.h.b16 %v585
    %v1221 = vunpack.c.l.b16 %v586
    %v1222 = vunpack.c.h.b16 %v586
    %v1223 = vunpack.c.l.b16 %v587
    %v1224 = vunpack.c.h.b16 %v587
    %v1225 = vunpack.c.l.b16 %v588
    %v1226 = vunpack.c.h.b16 %v588
    %v1227 = vunpack.c.l.b16 %v589
    %v1228 = vunpack.c.h.b16 %v589
    %v1229 = vunpack.c.l.b16 %v590
    %v1230 = vunpack.c.h.b16 %v590
    %v1231 = vunpack.c.l.b16 %v591
    %v1232 = vunpack.c.h.b16 %v591
    %v1233 = vunpack.c.l.b16 %v592
    %v1234 = vunpack.c.h.b16 %v592
    %v1235 = vunpack.c.l.b16 %v593
    %v1236 = vunpack.c.h.b16 %v593
    %v1237 = vunpack.c.l.b16 %v594
    %v1238 = vunpack.c.h.b16 %v594
    %v1239 = vunpack.c.l.b16 %v595
    %v1240 = vunpack.c.h.b16 %v595
    %v1241 = vunpack.c.l.b16 %v596
    %v1242 = vunpack.c.h.b16 %v596
    %v1243 = vunpack.c.l.b16 %v597
    %v1244 = vunpack.c.h.b16 %v597
    %v1245 = vunpack.c.l.b16 %v598
    %v1246 = vunpack.c.h.b16 %v598
    %v1247 = vunpack.c.l.b16 %v599
    %v1248 = vunpack.c.h.b16 %v599
    %v1249 = vunpack.c.l.b16 %v600
    %v1250 = vunpack.c.h.b16 %v600
    %v1251 = vunpack.c.l.b16 %v601
    %v1252 = vunpack.c.h.b16 %v601
    %v1253 = vunpack.c.l.b16 %v602
    %v1254 = vunpack.c.h.b16 %v602
    %v1255 = vunpack.c.l.b16 %v603
    %v1256 = vunpack.c.h.b16 %v603
    %v1257 = vunpack.c.l.b16 %v604
    %v1258 = vunpack.c.h.b16 %v604
    %v1259 = vunpack.c.l.b16 %v605
    %v1260 = vunpack.c.h.b16 %v605
    %v1261 = vunpack.c.l.b16 %v606
    %v1262 = vunpack.c.h.b16 %v606
    %v1263 = vunpack.c.l.b16 %v607
    %v1264 = vunpack.c.h.b16 %v607
    %v1265 = vunpack.c.l.b16 %v608
    %v1266 = vunpack.c.h.b16 %v608
    %v1267 = vunpack.c.l.b16 %v609
    %v1268 = vunpack.c.h.b16 %v609
    %v1269 = vunpack.c.l.b16 %v610
    %v1270 = vunpack.c.h.b16 %v610
    %v1271 = vunpack.c.l.b16 %v611
    %v1272 = vunpack.c.h.b16 %v611
    %v1273 = vunpack.c.l.b16 %v612
    %v1274 = vunpack.c.h.b16 %v612
    %v1275 = vunpack.c.l.b16 %v613
    %v1276 = vunpack.c.h.b16 %v613
    %v1277 = vunpack.c.l.b16 %v614
    %v1278 = vunpack.c.h.b16 %v614
    %v1279 = vunpack.c.l.b16 %v615
    %v1280 = vunpack.c.h.b16 %v615
    %v1281 = vunpack.c.l.b16 %v616
    %v1282 = vunpack.c.h.b16 %v616
    %v1283 = vunpack.c.l.b16 %v617
    %v1284 = vunpack.c.h.b16 %v617
    %v1285 = vunpack.c.l.b16 %v618
    %v1286 = vunpack.c.h.b16 %v618
    %v1287 = vunpack.c.l.b16 %v619
    %v1288 = vunpack.c.h.b16 %v619
    %v1289 = vunpack.c.l.b16 %v620
    %v1290 = vunpack.c.h.b16 %v620
    %v1291 = vunpack.c.l.b16 %v621
    %v1292 = vunpack.c.h.b16 %v621
    %v1293 = vunpack.c.l.b16 %v622
    %v1294 = vunpack.c.h.b16 %v622
    %v1295 = vunpack.c.l.b16 %v623
    %v1296 = vunpack.c.h.b16 %v623
    %v1297 = vunpack.c.l.b16 %v624
    %v1298 = vunpack.c.h.b16 %v624
    %v1299 = vunpack.c.l.b16 %v625
    %v1300 = vunpack.c.h.b16 %v625
    %v1301 = vunpack.c.l.b16 %v626
    %v1302 = vunpack.c.h.b16 %v626
    %v1303 = vunpack.c.l.b16 %v627
    %v1304 = vunpack.c.h.b16 %v627
    %v1305 = vunpack.c.l.b16 %v628
    %v1306 = vunpack.c.h.b16 %v628
    %v1307 = vunpack.c.l.b16 %v629
    %v1308 = vunpack.c.h.b16 %v629
    %v1309 = vunpack.c.l.b16 %v630
    %v1310 = vunpack.c.h.b16 %v630
    %v1311 = vunpack.c.l.b16 %v631
    %v1312 = vunpack.c.h.b16 %v631
    %v1313 = vunpack.c.l.b16 %v632
    %v1314 = vunpack.c.h.b16 %v632
    %v1315 = vunpack.c.l.b16 %v633
    %v1316 = vunpack.c.h.b16 %v633
    %v1317 = vunpack.c.l.b16 %v634
    %v1318 = vunpack.c.h.b16 %v634
    %v1319 = vunpack.c.l.b16 %v635
    %v1320 = vunpack.c.h.b16 %v635
    %v1321 = vunpack.c.l.b16 %v636
    %v1322 = vunpack.c.h.b16 %v636
    %v1323 = vunpack.c.l.b16 %v637
    %v1324 = vunpack.c.h.b16 %v637
    %v1325 = vunpack.c.l.b16 %v638
    %v1326 = vunpack.c.h.b16 %v638
    %v1327 = vunpack.c.l.b16 %v639
    %v1328 = vunpack.c.h.b16 %v639
    %v1329 = vunpack.c.l.b16 %v640
    %v1330 = vunpack.c.h.b16 %v640
    %v1331 = vunpack.c.l.b16 %v641
    %v1332 = vunpack.c.h.b16 %v641
    %v1333 = vunpack.c.l.b16 %v642
    %v1334 = vunpack.c.h.b16 %v642
    %v1335 = vunpack.c.l.b16 %v643
    %v1336 = vunpack.c.h.b16 %v643
    %v1337 = vunpack.c.l.b16 %v644
    %v1338 = vunpack.c.h.b16 %v644
    %v1339 = vunpack.c.l.b16 %v645
    %v1340 = vunpack.c.h.b16 %v645
    %v1341 = vunpack.c.l.b16 %v646
    %v1342 = vunpack.c.h.b16 %v646
    %v1343 = vunpack.c.l.b16 %v647
    %v1344 = vunpack.c.h.b16 %v647
    %v1345 = vunpack.c.l.b16 %v648
    %v1346 = vunpack.c.h.b16 %v648
    %v1347 = vunpack.c.l.b16 %v649
    %v1348 = vunpack.c.h.b16 %v649
    %v1349 = vunpack.c.l.b16 %v650
    %v1350 = vunpack.c.h.b16 %v650
    %v1351 = vunpack.c.l.b16 %v651
    %v1352 = vunpack.c.h.b16 %v651
    %v1353 = vunpack.c.l.b16 %v652
    %v1354 = vunpack.c.h.b16 %v652
    %v1355 = vpack.c.b16 %v941, %v939
    %v1356 = vpack.c.b16 %v942, %v940
    %v1357 = vpack.c.b16 %v945, %v943
    %v1358 = vpack.c.b16 %v946, %v944
    %v1359 = vpack.c.b16 %v949, %v947
    %v1360 = vpack.c.b16 %v950, %v948
    %v1361 = vpack.c.b16 %v953, %v951
    %v1362 = vpack.c.b16 %v954, %v952
    %v1363 = vpack.c.b16 %v957, %v955
    %v1364 = vpack.c.b16 %v958, %v956
    %v1365 = vpack.c.b16 %v961, %v959
    %v1366 = vpack.c.b16 %v962, %v960
    %v1367 = vpack.c.b16 %v965, %v963
    %v1368 = vpack.c.b16 %v966, %v964
    %v1369 = vpack.c.b16 %v969, %v967
    %v1370 = vpack.c.b16 %v970, %v968
    %v1371 = vpack.c.b16 %v973, %v971
    %v1372 = vpack.c.b16 %v974, %v972
    %v1373 = vpack.c.b16 %v977, %v975
    %v1374 = vpack.c.b16 %v978, %v976
    %v1375 = vpack.c.b16 %v981, %v979
    %v1376 = vpack.c.b16 %v982, %v980
    %v1377 = vpack.c.b16 %v985, %v983
    %v1378 = vpack.c.b16 %v986, %v984
    %v1379 = vpack.c.b16 %v989, %v987
    %v1380 = vpack.c.b16 %v990, %v988
    %v1381 = vpack.c.b16 %v993, %v991
    %v1382 = vpack.c.b16 %v994, %v992
    %v1383 = vpack.c.b16 %v997, %v995
    %v1384 = vpack.c.b16 %v998, %v996
    %v1385 = vpack.c.b16 %v1001, %v999
    %v1386 = vpack.c.b16 %v1002, %v1000
    %v1387 = vpack.c.b16 %v1005, %v1003
    %v1388 = vpack.c.b16 %v1006, %v1004
    %v1389 = vpack.c.b16 %v1009, %v1007
    %v1390 = vpack.c.b16 %v1010, %v1008
    %v1391 = vpack.c.b16 %v1013, %v1011
    %v1392 = vpack.c.b16 %v1014, %v1012
    %v1393 = vpack.c.b16 %v1017, %v1015
    %v1394 = vpack.c.b16 %v1018, %v1016
    %v1395 = vpack.c.b16 %v1021, %v1019
    %v1396 = vpack.c.b16 %v1022, %v1020
    %v1397 = vpack.c.b16 %v1025, %v1023
    %v1398 = vpack.c.b16 %v1026, %v1024
    %v1399 = vpack.c.b16 %v1029, %v1027
    %v1400 = vpack.c.b16 %v1030, %v1028
    %v1401 = vpack.c.b16 %v1033, %v1031
    %v1402 = vpack.c.b16 %v1034, %v1032
    %v1403 = vpack.c.b16 %v1037, %v1035
    %v1404 = vpack.c.b16 %v1038, %v1036
    %v1405 = vpack.c.b16 %v1041, %v1039
    %v1406 = vpack.c.b16 %v1042, %v1040
    %v1407 = vpack.c.b16 %v1045, %v1043
    %v1408 = vpack.c.b16 %v1046, %v1044
    %v1409 = vpack.c.b16 %v1049, %v1047
    %v1410 = vpack.c.b16 %v1050, %v1048
    %v1411 = vpack.c.b16 %v1053, %v1051
    %v1412 = vpack.c.b16 %v1054, %v1052
    %v1413 = vpack.c.b16 %v1057, %v1055
    %v1414 = vpack.c.b16 %v1058, %v1056
    %v1415 = vpack.c.b16 %v1061, %v1059
    %v1416 = vpack.c.b16 %v1062, %v1060
    %v1417 = vpack.c.b16 %v1065, %v1063
    %v1418 = vpack.c.b16 %v1066, %v1064
    %v1419 = vpack.c.b16 %v1069, %v1067
    %v1420 = vpack.c.b16 %v1070, %v1068
    %v1421 = vpack.c.b16 %v1073, %v1071
    %v1422 = vpack.c.b16 %v1074, %v1072
    %v1423 = vpack.c.b16 %v1077, %v1075
    %v1424 = vpack.c.b16 %v1078, %v1076
    %v1425 = vpack.c.b16 %v1081, %v1079
    %v1426 = vpack.c.b16 %v1082, %v1080
    %v1427 = vpack.c.b16 %v1085, %v1083
    %v1428 = vpack.c.b16 %v1086, %v1084
    %v1429 = vpack.c.b16 %v1089, %v1087
    %v1430 = vpack.c.b16 %v1090, %v1088
    %v1431 = vpack.c.b16 %v1093, %v1091
    %v1432 = vpack.c.b16 %v1094, %v1092
    %v1433 = vpack.c.b16 %v1097, %v1095
    %v1434 = vpack.c.b16 %v1098, %v1096
    %v1435 = vpack.c.b16 %v1101, %v1099
    %v1436 = vpack.c.b16 %v1102, %v1100
    %v1437 = vpack.c.b16 %v1105, %v1103
    %v1438 = vpack.c.b16 %v1106, %v1104
    %v1439 = vpack.c.b16 %v1109, %v1107
    %v1440 = vpack.c.b16 %v1110, %v1108
    %v1441 = vpack.c.b16 %v1113, %v1111
    %v1442 = vpack.c.b16 %v1114, %v1112
    %v1443 = vpack.c.b16 %v1117, %v1115
    %v1444 = vpack.c.b16 %v1118, %v1116
    %v1445 = vpack.c.b16 %v1121, %v1119
    %v1446 = vpack.c.b16 %v1122, %v1120
    %v1447 = vpack.c.b16 %v1125, %v1123
    %v1448 = vpack.c.b16 %v1126, %v1124
    %v1449 = vpack.c.b16 %v1129, %v1127
    %v1450 = vpack.c.b16 %v1130, %v1128
    %v1451 = vpack.c.b16 %v1133, %v1131
    %v1452 = vpack.c.b16 %v1134, %v1132
    %v1453 = vpack.c.b16 %v1137, %v1135
    %v1454 = vpack.c.b16 %v1138, %v1136
    %v1455 = vpack.c.b16 %v1141, %v1139
    %v1456 = vpack.c.b16 %v1142, %v1140
    %v1457 = vpack.c.b16 %v1145, %v1143
    %v1458 = vpack.c.b16 %v1146, %v1144
    %v1459 = vpack.c.b16 %v1149, %v1147
    %v1460 = vpack.c.b16 %v1150, %v1148
    %v1461 = vpack.c.b16 %v1153, %v1151
    %v1462 = vpack.c.b16 %v1154, %v1152
    %v1463 = vpack.c.b16 %v1157, %v1155
    %v1464 = vpack.c.b16 %v1158, %v1156
    %v1465 = vpack.c.b16 %v1161, %v1159
    %v1466 = vpack.c.b16 %v1162, %v1160
    %v1467 = vpack.c.b16 %v1165, %v1163
    %v1468 = vpack.c.b16 %v1166, %v1164
    %v1469 = vpack.c.b16 %v1169, %v1167
    %v1470 = vpack.c.b16 %v1170, %v1168
    %v1471 = vpack.c.b16 %v1173, %v1171
    %v1472 = vpack.c.b16 %v1174, %v1172
    %v1473 = vpack.c.b16 %v1177, %v1175
    %v1474 = vpack.c.b16 %v1178, %v1176
    %v1475 = vpack.c.b16 %v1181, %v1179
    %v1476 = vpack.c.b16 %v1182, %v1180
    %v1477 = vpack.c.b16 %v1185, %v1183
    %v1478 = vpack.c.b16 %v1186, %v1184
    %v1479 = vpack.c.b16 %v1189, %v1187
    %v1480 = vpack.c.b16 %v1190, %v1188
    %v1481 = vpack.c.b16 %v1193, %v1191
    %v1482 = vpack.c.b16 %v1194, %v1192
    %v1483 = vpack.c.b16 %v1197, %v1195
    %v1484 = vpack.c.b16 %v1198, %v1196
    %v1485 = vpack.c.b16 %v1201, %v1199
    %v1486 = vpack.c.b16 %v1202, %v1200
    %v1487 = vpack.c.b16 %v1205, %v1203
    %v1488 = vpack.c.b16 %v1206, %v1204
    %v1489 = vpack.c.b16 %v1209, %v1207
    %v1490 = vpack.c.b16 %v1210, %v1208
    %v1491 = vpack.c.b16 %v1213, %v1211
    %v1492 = vpack.c.b16 %v1214, %v1212
    %v1493 = vpack.c.b16 %v1217, %v1215
    %v1494 = vpack.c.b16 %v1218, %v1216
    %v1495 = vpack.c.b16 %v1221, %v1219
    %v1496 = vpack.c.b16 %v1222, %v1220
    %v1497 = vpack.c.b16 %v1225, %v1223
    %v1498 = vpack.c.b16 %v1226, %v1224
    %v1499 = vpack.c.b16 %v1229, %v1227
    %v1500 = vpack.c.b16 %v1230, %v1228
    %v1501 = vpack.c.b16 %v1233, %v1231
    %v1502 = vpack.c.b16 %v1234, %v1232
    %v1503 = vpack.c.b16 %v1237, %v1235
    %v1504 = vpack.c.b16 %v1238, %v1236
    %v1505 = vpack.c.b16 %v1241, %v1239
    %v1506 = vpack.c.b16 %v1242, %v1240
    %v1507 = vpack.c.b16 %v1245, %v1243
    %v1508 = vpack.c.b16 %v1246, %v1244
    %v1509 = vpack.c.b16 %v1249, %v1247
    %v1510 = vpack.c.b16 %v1250, %v1248
    %v1511 = vpack.c.b16 %v1253, %v1251
    %v1512 = vpack.c.b16 %v1254, %v1252
    %v1513 = vpack.c.b16 %v1257, %v1255
    %v1514 = vpack.c.b16 %v1258, %v1256
    %v1515 = vpack.c.b16 %v1261, %v1259
    %v1516 = vpack.c.b16 %v1262, %v1260
    %v1517 = vpack.c.b16 %v1265, %v1263
    %v1518 = vpack.c.b16 %v1266, %v1264
    %v1519 = vpack.c.b16 %v1269, %v1267
    %v1520 = vpack.c.b16 %v1270, %v1268
    %v1521 = vpack.c.b16 %v1273, %v1271
    %v1522 = vpack.c.b16 %v1274, %v1272
    %v1523 = vpack.c.b16 %v1277, %v1275
    %v1524 = vpack.c.b16 %v1278, %v1276
    %v1525 = vpack.c.b16 %v1281, %v1279
    %v1526 = vpack.c.b16 %v1282, %v1280
    %v1527 = vpack.c.b16 %v1285, %v1283
    %v1528 = vpack.c.b16 %v1286, %v1284
    %v1529 = vpack.c.b16 %v1289, %v1287
    %v1530 = vpack.c.b16 %v1290, %v1288
    %v1531 = vpack.c.b16 %v1293, %v1291
    %v1532 = vpack.c.b16 %v1294, %v1292
    %v1533 = vpack.c.b16 %v1297, %v1295
    %v1534 = vpack.c.b16 %v1298, %v1296
    %v1535 = vpack.c.b16 %v1301, %v1299
    %v1536 = vpack.c.b16 %v1302, %v1300
    %v1537 = vpack.c.b16 %v1305, %v1303
    %v1538 = vpack.c.b16 %v1306, %v1304
    %v1539 = vpack.c.b16 %v1309, %v1307
    %v1540 = vpack.c.b16 %v1310, %v1308
    %v1541 = vpack.c.b16 %v1313, %v1311
    %v1542 = vpack.c.b16 %v1314, %v1312
    %v1543 = vpack.c.b16 %v1317, %v1315
    %v1544 = vpack.c.b16 %v1318, %v1316
    %v1545 = vpack.c.b16 %v1321, %v1319
    %v1546 = vpack.c.b16 %v1322, %v1320
    %v1547 = vpack.c.b16 %v1325, %v1323
    %v1548 = vpack.c.b16 %v1326, %v1324
    %v1549 = vpack.c.b16 %v1329, %v1327
    %v1550 = vpack.c.b16 %v1330, %v1328
    %v1551 = vpack.c.b16 %v1333, %v1331
    %v1552 = vpack.c.b16 %v1334, %v1332
    %v1553 = vpack.c.b16 %v1337, %v1335
    %v1554 = vpack.c.b16 %v1338, %v1336
    %v1555 = vpack.c.b16 %v1341, %v1339
    %v1556 = vpack.c.b16 %v1342, %v1340
    %v1557 = vpack.c.b16 %v1345, %v1343
    %v1558 = vpack.c.b16 %v1346, %v1344
    %v1559 = vpack.c.b16 %v1349, %v1347
    %v1560 = vpack.c.b16 %v1350, %v1348
    %v1561 = vpack.c.b16 %v1353, %v1351
    %v1562 = vpack.c.b16 %v1354, %v1352
    %1771 = vmatprep.subr.bf16.mxu0 %v1370
    %1772 = vmatpush1.bf16.msra.mxu0 %v1369
    %1773 = vmatprep.subr.bf16.mxu0 %v1368
    %1774 = vmatpush1.bf16.msra.mxu0 %v1367
    %1775 = vmatprep.subr.bf16.mxu0 %v1366
    %1776 = vmatpush1.bf16.msra.mxu0 %v1365
    %1777 = vmatprep.subr.bf16.mxu0 %v1364
    %1778 = vmatpush1.bf16.msra.mxu0 %v1363
    %1779 = vmatprep.subr.bf16.mxu0 %v1362
    %1780 = vmatpush1.bf16.msra.mxu0 %v1361
    %1781 = vmatprep.subr.bf16.mxu0 %v1360
    %1782 = vmatpush1.bf16.msra.mxu0 %v1359
    %1783 = vmatprep.subr.bf16.mxu0 %v1358
    %1784 = vmatpush1.bf16.msra.mxu0 %v1357
    %1785 = vmatprep.subr.bf16.mxu0 %v1356
    %1786 = vmatpush1.bf16.msra.mxu0 %v1355
    %1787 = vmatprep.subr.bf16.mxu0 %v1386
    %1788 = vmatpush2.bf16.msra.mxu0 %v1385
    %1789 = vmatprep.subr.bf16.mxu0 %v1384
    %1790 = vmatpush2.bf16.msra.mxu0 %v1383
    %1791 = vmatprep.subr.bf16.mxu0 %v1382
    %1792 = vmatpush2.bf16.msra.mxu0 %v1381
    %1793 = vmatprep.subr.bf16.mxu0 %v1380
    %1794 = vmatpush2.bf16.msra.mxu0 %v1379
    %1795 = vmatprep.subr.bf16.mxu0 %v1378
    %1796 = vmatpush2.bf16.msra.mxu0 %v1377
    %1797 = vmatprep.subr.bf16.mxu0 %v1376
    %1798 = vmatpush2.bf16.msra.mxu0 %v1375
    %1799 = vmatprep.subr.bf16.mxu0 %v1374
    %1800 = vmatpush2.bf16.msra.mxu0 %v1373
    %1801 = vmatprep.subr.bf16.mxu0 %v1372
    %1802 = vmatpush2.bf16.msra.mxu0 %v1371
    %1803 = vmatprep.mubr.bf16.mxu0 %v706
    %1804 = vmatmul.mubr.bf16.gmra.mxu0 %v705
    %v1805 = vpop.f32.mrf.mxu0
    %v1806 = vadd.f32 %v658, %v1805
    %v1807 = vpop.f32.mrf.mxu0
    %v1808 = vadd.f32 %v662, %v1807
    %v1809 = vpop.f32.mrf.mxu0
    %v1810 = vadd.f32 %v658, %v1809
    %v1811 = vpop.f32.mrf.mxu0
    %v1812 = vadd.f32 %v662, %v1811
    %1813 = vdwg.mxu0
    %1814 = vmatprep.subr.bf16.mxu0 %v1402
    %1815 = vmatpush1.bf16.msra.mxu0 %v1401
    %1816 = vmatprep.subr.bf16.mxu0 %v1400
    %1817 = vmatpush1.bf16.msra.mxu0 %v1399
    %1818 = vmatprep.subr.bf16.mxu0 %v1398
    %1819 = vmatpush1.bf16.msra.mxu0 %v1397
    %1820 = vmatprep.subr.bf16.mxu0 %v1396
    %1821 = vmatpush1.bf16.msra.mxu0 %v1395
    %1822 = vmatprep.subr.bf16.mxu0 %v1394
    %1823 = vmatpush1.bf16.msra.mxu0 %v1393
    %1824 = vmatprep.subr.bf16.mxu0 %v1392
    %1825 = vmatpush1.bf16.msra.mxu0 %v1391
    %1826 = vmatprep.subr.bf16.mxu0 %v1390
    %1827 = vmatpush1.bf16.msra.mxu0 %v1389
    %1828 = vmatprep.subr.bf16.mxu0 %v1388
    %1829 = vmatpush1.bf16.msra.mxu0 %v1387
    %1830 = vmatprep.subr.bf16.mxu0 %v1418
    %1831 = vmatpush2.bf16.msra.mxu0 %v1417
    %1832 = vmatprep.subr.bf16.mxu0 %v1416
    %1833 = vmatpush2.bf16.msra.mxu0 %v1415
    %1834 = vmatprep.subr.bf16.mxu0 %v1414
    %1835 = vmatpush2.bf16.msra.mxu0 %v1413
    %1836 = vmatprep.subr.bf16.mxu0 %v1412
    %1837 = vmatpush2.bf16.msra.mxu0 %v1411
    %1838 = vmatprep.subr.bf16.mxu0 %v1410
    %1839 = vmatpush2.bf16.msra.mxu0 %v1409
    %1840 = vmatprep.subr.bf16.mxu0 %v1408
    %1841 = vmatpush2.bf16.msra.mxu0 %v1407
    %1842 = vmatprep.subr.bf16.mxu0 %v1406
    %1843 = vmatpush2.bf16.msra.mxu0 %v1405
    %1844 = vmatprep.subr.bf16.mxu0 %v1404
    %1845 = vmatpush2.bf16.msra.mxu0 %v1403
    %1846 = vmatprep.mubr.bf16.mxu0 %v708
    %1847 = vmatmul.mubr.bf16.gmra.mxu0 %v707
    %v1848 = vpop.f32.mrf.mxu0
    %v1849 = vadd.f32 %v1806, %v1848
    %v1850 = vpop.f32.mrf.mxu0
    %v1851 = vadd.f32 %v1808, %v1850
    %v1852 = vpop.f32.mrf.mxu0
    %v1853 = vadd.f32 %v1810, %v1852
    %v1854 = vpop.f32.mrf.mxu0
    %v1855 = vadd.f32 %v1812, %v1854
    %1856 = vdwg.mxu0
    %1857 = vmatprep.subr.bf16.mxu0 %v1434
    %1858 = vmatpush1.bf16.msra.mxu0 %v1433
    %1859 = vmatprep.subr.bf16.mxu0 %v1432
    %1860 = vmatpush1.bf16.msra.mxu0 %v1431
    %1861 = vmatprep.subr.bf16.mxu0 %v1430
    %1862 = vmatpush1.bf16.msra.mxu0 %v1429
    %1863 = vmatprep.subr.bf16.mxu0 %v1428
    %1864 = vmatpush1.bf16.msra.mxu0 %v1427
    %1865 = vmatprep.subr.bf16.mxu0 %v1426
    %1866 = vmatpush1.bf16.msra.mxu0 %v1425
    %1867 = vmatprep.subr.bf16.mxu0 %v1424
    %1868 = vmatpush1.bf16.msra.mxu0 %v1423
    %1869 = vmatprep.subr.bf16.mxu0 %v1422
    %1870 = vmatpush1.bf16.msra.mxu0 %v1421
    %1871 = vmatprep.subr.bf16.mxu0 %v1420
    %1872 = vmatpush1.bf16.msra.mxu0 %v1419
    %1873 = vmatprep.subr.bf16.mxu0 %v1450
    %1874 = vmatpush2.bf16.msra.mxu0 %v1449
    %1875 = vmatprep.subr.bf16.mxu0 %v1448
    %1876 = vmatpush2.bf16.msra.mxu0 %v1447
    %1877 = vmatprep.subr.bf16.mxu0 %v1446
    %1878 = vmatpush2.bf16.msra.mxu0 %v1445
    %1879 = vmatprep.subr.bf16.mxu0 %v1444
    %1880 = vmatpush2.bf16.msra.mxu0 %v1443
    %1881 = vmatprep.subr.bf16.mxu0 %v1442
    %1882 = vmatpush2.bf16.msra.mxu0 %v1441
    %1883 = vmatprep.subr.bf16.mxu0 %v1440
    %1884 = vmatpush2.bf16.msra.mxu0 %v1439
    %1885 = vmatprep.subr.bf16.mxu0 %v1438
    %1886 = vmatpush2.bf16.msra.mxu0 %v1437
    %1887 = vmatprep.subr.bf16.mxu0 %v1436
    %1888 = vmatpush2.bf16.msra.mxu0 %v1435
    %1889 = vmatprep.mubr.bf16.mxu0 %v710
    %1890 = vmatmul.mubr.bf16.gmra.mxu0 %v709
    %v1891 = vpop.f32.mrf.mxu0
    %v1892 = vadd.f32 %v1849, %v1891
    %v1893 = vpop.f32.mrf.mxu0
    %v1894 = vadd.f32 %v1851, %v1893
    %v1895 = vpop.f32.mrf.mxu0
    %v1896 = vadd.f32 %v1853, %v1895
    %v1897 = vpop.f32.mrf.mxu0
    %v1898 = vadd.f32 %v1855, %v1897
    %1899 = vdwg.mxu0
    %1900 = vmatprep.subr.bf16.mxu0 %v1466
    %1901 = vmatpush1.bf16.msra.mxu0 %v1465
    %1902 = vmatprep.subr.bf16.mxu0 %v1464
    %1903 = vmatpush1.bf16.msra.mxu0 %v1463
    %1904 = vmatprep.subr.bf16.mxu0 %v1462
    %1905 = vmatpush1.bf16.msra.mxu0 %v1461
    %1906 = vmatprep.subr.bf16.mxu0 %v1460
    %1907 = vmatpush1.bf16.msra.mxu0 %v1459
    %1908 = vmatprep.subr.bf16.mxu0 %v1458
    %1909 = vmatpush1.bf16.msra.mxu0 %v1457
    %1910 = vmatprep.subr.bf16.mxu0 %v1456
    %1911 = vmatpush1.bf16.msra.mxu0 %v1455
    %1912 = vmatprep.subr.bf16.mxu0 %v1454
    %1913 = vmatpush1.bf16.msra.mxu0 %v1453
    %1914 = vmatprep.subr.bf16.mxu0 %v1452
    %1915 = vmatpush1.bf16.msra.mxu0 %v1451
    %1916 = vmatprep.subr.bf16.mxu0 %v1482
    %1917 = vmatpush2.bf16.msra.mxu0 %v1481
    %1918 = vmatprep.subr.bf16.mxu0 %v1480
    %1919 = vmatpush2.bf16.msra.mxu0 %v1479
    %1920 = vmatprep.subr.bf16.mxu0 %v1478
    %1921 = vmatpush2.bf16.msra.mxu0 %v1477
    %1922 = vmatprep.subr.bf16.mxu0 %v1476
    %1923 = vmatpush2.bf16.msra.mxu0 %v1475
    %1924 = vmatprep.subr.bf16.mxu0 %v1474
    %1925 = vmatpush2.bf16.msra.mxu0 %v1473
    %1926 = vmatprep.subr.bf16.mxu0 %v1472
    %1927 = vmatpush2.bf16.msra.mxu0 %v1471
    %1928 = vmatprep.subr.bf16.mxu0 %v1470
    %1929 = vmatpush2.bf16.msra.mxu0 %v1469
    %1930 = vmatprep.subr.bf16.mxu0 %v1468
    %1931 = vmatpush2.bf16.msra.mxu0 %v1467
    %1932 = vmatprep.mubr.bf16.mxu0 %v712
    %1933 = vmatmul.mubr.bf16.gmra.mxu0 %v711
    %v1934 = vpop.f32.mrf.mxu0
    %v1935 = vadd.f32 %v1892, %v1934
    %v1936 = vpop.f32.mrf.mxu0
    %v1937 = vadd.f32 %v1894, %v1936
    %v1938 = vpop.f32.mrf.mxu0
    %v1939 = vadd.f32 %v1896, %v1938
    %v1940 = vpop.f32.mrf.mxu0
    %v1941 = vadd.f32 %v1898, %v1940
    %1942 = vdwg.mxu0
    %1943 = vmatprep.subr.bf16.mxu0 %v1498
    %1944 = vmatpush1.bf16.msra.mxu0 %v1497
    %1945 = vmatprep.subr.bf16.mxu0 %v1496
    %1946 = vmatpush1.bf16.msra.mxu0 %v1495
    %1947 = vmatprep.subr.bf16.mxu0 %v1494
    %1948 = vmatpush1.bf16.msra.mxu0 %v1493
    %1949 = vmatprep.subr.bf16.mxu0 %v1492
    %1950 = vmatpush1.bf16.msra.mxu0 %v1491
    %1951 = vmatprep.subr.bf16.mxu0 %v1490
    %1952 = vmatpush1.bf16.msra.mxu0 %v1489
    %1953 = vmatprep.subr.bf16.mxu0 %v1488
    %1954 = vmatpush1.bf16.msra.mxu0 %v1487
    %1955 = vmatprep.subr.bf16.mxu0 %v1486
    %1956 = vmatpush1.bf16.msra.mxu0 %v1485
    %1957 = vmatprep.subr.bf16.mxu0 %v1484
    %1958 = vmatpush1.bf16.msra.mxu0 %v1483
    %1959 = vmatprep.subr.bf16.mxu0 %v1514
    %1960 = vmatpush2.bf16.msra.mxu0 %v1513
    %1961 = vmatprep.subr.bf16.mxu0 %v1512
    %1962 = vmatpush2.bf16.msra.mxu0 %v1511
    %1963 = vmatprep.subr.bf16.mxu0 %v1510
    %1964 = vmatpush2.bf16.msra.mxu0 %v1509
    %1965 = vmatprep.subr.bf16.mxu0 %v1508
    %1966 = vmatpush2.bf16.msra.mxu0 %v1507
    %1967 = vmatprep.subr.bf16.mxu0 %v1506
    %1968 = vmatpush2.bf16.msra.mxu0 %v1505
    %1969 = vmatprep.subr.bf16.mxu0 %v1504
    %1970 = vmatpush2.bf16.msra.mxu0 %v1503
    %1971 = vmatprep.subr.bf16.mxu0 %v1502
    %1972 = vmatpush2.bf16.msra.mxu0 %v1501
    %1973 = vmatprep.subr.bf16.mxu0 %v1500
    %1974 = vmatpush2.bf16.msra.mxu0 %v1499
    %1975 = vmatprep.mubr.bf16.mxu0 %v714
    %1976 = vmatmul.mubr.bf16.gmra.mxu0 %v713
    %v1977 = vpop.f32.mrf.mxu0
    %v1978 = vadd.f32 %v1935, %v1977
    %v1979 = vpop.f32.mrf.mxu0
    %v1980 = vadd.f32 %v1937, %v1979
    %v1981 = vpop.f32.mrf.mxu0
    %v1982 = vadd.f32 %v1939, %v1981
    %v1983 = vpop.f32.mrf.mxu0
    %v1984 = vadd.f32 %v1941, %v1983
    %1985 = vdwg.mxu0
    %1986 = vmatprep.subr.bf16.mxu0 %v1530
    %1987 = vmatpush1.bf16.msra.mxu0 %v1529
    %1988 = vmatprep.subr.bf16.mxu0 %v1528
    %1989 = vmatpush1.bf16.msra.mxu0 %v1527
    %1990 = vmatprep.subr.bf16.mxu0 %v1526
    %1991 = vmatpush1.bf16.msra.mxu0 %v1525
    %1992 = vmatprep.subr.bf16.mxu0 %v1524
    %1993 = vmatpush1.bf16.msra.mxu0 %v1523
    %1994 = vmatprep.subr.bf16.mxu0 %v1522
    %1995 = vmatpush1.bf16.msra.mxu0 %v1521
    %1996 = vmatprep.subr.bf16.mxu0 %v1520
    %1997 = vmatpush1.bf16.msra.mxu0 %v1519
    %1998 = vmatprep.subr.bf16.mxu0 %v1518
    %1999 = vmatpush1.bf16.msra.mxu0 %v1517
    %2000 = vmatprep.subr.bf16.mxu0 %v1516
    %2001 = vmatpush1.bf16.msra.mxu0 %v1515
    %2002 = vmatprep.subr.bf16.mxu0 %v1546
    %2003 = vmatpush2.bf16.msra.mxu0 %v1545
    %2004 = vmatprep.subr.bf16.mxu0 %v1544
    %2005 = vmatpush2.bf16.msra.mxu0 %v1543
    %2006 = vmatprep.subr.bf16.mxu0 %v1542
    %2007 = vmatpush2.bf16.msra.mxu0 %v1541
    %2008 = vmatprep.subr.bf16.mxu0 %v1540
    %2009 = vmatpush2.bf16.msra.mxu0 %v1539
    %2010 = vmatprep.subr.bf16.mxu0 %v1538
    %2011 = vmatpush2.bf16.msra.mxu0 %v1537
    %2012 = vmatprep.subr.bf16.mxu0 %v1536
    %2013 = vmatpush2.bf16.msra.mxu0 %v1535
    %2014 = vmatprep.subr.bf16.mxu0 %v1534
    %2015 = vmatpush2.bf16.msra.mxu0 %v1533
    %2016 = vmatprep.subr.bf16.mxu0 %v1532
    %2017 = vmatpush2.bf16.msra.mxu0 %v1531
    %2018 = vmatprep.mubr.bf16.mxu0 %v716
    %2019 = vmatmul.mubr.bf16.gmra.mxu0 %v715
    %v2020 = vpop.f32.mrf.mxu0
    %v2021 = vadd.f32 %v1978, %v2020
    %v2022 = vpop.f32.mrf.mxu0
    %v2023 = vadd.f32 %v1980, %v2022
    %v2024 = vpop.f32.mrf.mxu0
    %v2025 = vadd.f32 %v1982, %v2024
    %v2026 = vpop.f32.mrf.mxu0
    %v2027 = vadd.f32 %v1984, %v2026
    %2028 = vdwg.mxu0
    %2029 = vmatprep.subr.bf16.mxu0 %v1562
    %2030 = vmatpush1.bf16.msra.mxu0 %v1561
    %2031 = vmatprep.subr.bf16.mxu0 %v1560
    %2032 = vmatpush1.bf16.msra.mxu0 %v1559
    %2033 = vmatprep.subr.bf16.mxu0 %v1558
    %2034 = vmatpush1.bf16.msra.mxu0 %v1557
    %2035 = vmatprep.subr.bf16.mxu0 %v1556
    %2036 = vmatpush1.bf16.msra.mxu0 %v1555
    %2037 = vmatprep.subr.bf16.mxu0 %v1554
    %2038 = vmatpush1.bf16.msra.mxu0 %v1553
    %2039 = vmatprep.subr.bf16.mxu0 %v1552
    %2040 = vmatpush1.bf16.msra.mxu0 %v1551
    %2041 = vmatprep.subr.bf16.mxu0 %v1550
    %2042 = vmatpush1.bf16.msra.mxu0 %v1549
    %2043 = vmatprep.subr.bf16.mxu0 %v1548
    %2044 = vmatpush1.bf16.msra.mxu0 %v1547
    %2045 = vmatprep.subr.bf16.mxu0 0
    %2046 = vmatpush2.bf16.msra.mxu0 0
    %2047 = vmatprep.subr.bf16.mxu0 0
    %2048 = vmatpush2.bf16.msra.mxu0 0
    %2049 = vmatprep.subr.bf16.mxu0 0
    %2050 = vmatpush2.bf16.msra.mxu0 0
    %2051 = vmatprep.subr.bf16.mxu0 0
    %2052 = vmatpush2.bf16.msra.mxu0 0
    %2053 = vmatprep.subr.bf16.mxu0 0
    %2054 = vmatpush2.bf16.msra.mxu0 0
    %2055 = vmatprep.subr.bf16.mxu0 0
    %2056 = vmatpush2.bf16.msra.mxu0 0
    %2057 = vmatprep.subr.bf16.mxu0 0
    %2058 = vmatpush2.bf16.msra.mxu0 0
    %2059 = vmatprep.subr.bf16.mxu0 0
    %2060 = vmatpush2.bf16.msra.mxu0 0
    %2061 = vmatprep.mubr.bf16.mxu0 0
    %2062 = vmatmul.mubr.bf16.gmra.mxu0 %v717
    %v2063 = vpop.f32.mrf.mxu0
    %v2064 = vadd.f32 %v2021, %v2063
    %v2065 = vpop.f32.mrf.mxu0
    %v2066 = vadd.f32 %v2023, %v2065
    %v2067 = vpop.f32.mrf.mxu0
    %v2068 = vadd.f32 %v2025, %v2067
    %v2069 = vpop.f32.mrf.mxu0
    %v2070 = vadd.f32 %v2027, %v2069
    %2071 = vdwg.mxu0
    %v2072 = vmax.f32 %v2064, 0.0
    %v2073 = vmax.f32 %v2066, 0.0
    %v2074 = vmax.f32 %v2068, 0.0
    %v2075 = vmax.f32 %v2070, 0.0
    %v2076 = vpack.c.bf16 %v2074, %v2072
    %v2077 = vpack.c.bf16 %v2075, %v2073
    %v2078 = vld [vmem:[#allocation10] sm:$0xf]
    %v2079 = vld [vmem:[#allocation10 + $0x4] sm:$0xf]
    %v2080 = vld [vmem:[#allocation10 + $0x8] sm:$0xf]
    %v2081 = vld [vmem:[#allocation10 + $0xc] sm:$0xf]
    %v2082 = vld [vmem:[#allocation10 + $0x10] sm:$0xf]
    %v2083 = vld [vmem:[#allocation10 + $0x14] sm:$0xf]
    %v2084 = vld [vmem:[#allocation10 + $0x18] sm:$0xf]
    %v2085 = vld [vmem:[#allocation10 + $0x1c] sm:$0xf]
    %v2086 = vld [vmem:[#allocation10 + $0x20] sm:$0xf]
    %v2087 = vld [vmem:[#allocation10 + $0x24] sm:$0xf]
    %v2088 = vld [vmem:[#allocation10 + $0x28] sm:$0xf]
    %v2089 = vld [vmem:[#allocation10 + $0x2c] sm:$0xf]
    %v2090 = vld [vmem:[#allocation10 + $0x30] sm:$0xf]
    %v2091 = vld [vmem:[#allocation10 + $0x34] sm:$0xf]
    %v2092 = vld [vmem:[#allocation10 + $0x38] sm:$0xf]
    %v2093 = vld [vmem:[#allocation10 + $0x3c] sm:$0xf]
    %v2094 = vld [vmem:[#allocation10 + $0x40] sm:$0xf]
    %v2095 = vld [vmem:[#allocation10 + $0x44] sm:$0xf]
    %v2096 = vld [vmem:[#allocation10 + $0x48] sm:$0xf]
    %v2097 = vld [vmem:[#allocation10 + $0x4c] sm:$0xf]
    %v2098 = vld [vmem:[#allocation10 + $0x50] sm:$0xf]
    %v2099 = vld [vmem:[#allocation10 + $0x54] sm:$0xf]
    %v2100 = vld [vmem:[#allocation10 + $0x58] sm:$0xf]
    %v2101 = vld [vmem:[#allocation10 + $0x5c] sm:$0xf]
    %v2102 = vld [vmem:[#allocation10 + $0x60] sm:$0xf]
    %v2103 = vld [vmem:[#allocation10 + $0x64] sm:$0xf]
    %v2104 = vld [vmem:[#allocation10 + $0x68] sm:$0xf]
    %v2105 = vld [vmem:[#allocation10 + $0x6c] sm:$0xf]
    %v2106 = vld [vmem:[#allocation10 + $0x70] sm:$0xf]
    %v2107 = vld [vmem:[#allocation10 + $0x74] sm:$0xf]
    %v2108 = vld [vmem:[#allocation10 + $0x78] sm:$0xf]
    %v2109 = vld [vmem:[#allocation10 + $0x7c] sm:$0xf]
    %v2110 = vld [vmem:[%s3] sm:$0x1]
    %v2112 = vlaneseq
    %v2113 = vshrl.u32 %v2112, 7
    %v2114 = vsub.s32 0, %v2113
    %v2115 = vrot.slane %v2110, %v2114
    %v2149 = vunpack.c.l.b16 %v2078
    %v2150 = vunpack.c.l.b16 %v2079
    %v2151 = vunpack.c.l.b16 %v2080
    %v2152 = vunpack.c.l.b16 %v2081
    %v2153 = vunpack.c.l.b16 %v2082
    %v2154 = vunpack.c.l.b16 %v2083
    %v2155 = vunpack.c.l.b16 %v2084
    %v2156 = vunpack.c.l.b16 %v2085
    %v2157 = vunpack.c.l.b16 %v2086
    %v2158 = vunpack.c.l.b16 %v2087
    %v2159 = vunpack.c.l.b16 %v2088
    %v2160 = vunpack.c.l.b16 %v2089
    %v2161 = vunpack.c.l.b16 %v2090
    %v2162 = vunpack.c.l.b16 %v2091
    %v2163 = vunpack.c.l.b16 %v2092
    %v2164 = vunpack.c.l.b16 %v2093
    %v2165 = vunpack.c.l.b16 %v2094
    %v2166 = vunpack.c.l.b16 %v2095
    %v2167 = vunpack.c.l.b16 %v2096
    %v2168 = vunpack.c.l.b16 %v2097
    %v2169 = vunpack.c.l.b16 %v2098
    %v2170 = vunpack.c.l.b16 %v2099
    %v2171 = vunpack.c.l.b16 %v2100
    %v2172 = vunpack.c.l.b16 %v2101
    %v2173 = vunpack.c.l.b16 %v2102
    %v2174 = vunpack.c.l.b16 %v2103
    %v2175 = vunpack.c.l.b16 %v2104
    %v2176 = vunpack.c.l.b16 %v2105
    %v2177 = vunpack.c.l.b16 %v2106
    %v2178 = vunpack.c.l.b16 %v2107
    %v2179 = vunpack.c.l.b16 %v2108
    %v2180 = vunpack.c.l.b16 %v2109
    %v2181 = vpack.c.b16 %v2150, %v2149
    %v2182 = vpack.c.b16 %v2152, %v2151
    %v2183 = vpack.c.b16 %v2154, %v2153
    %v2184 = vpack.c.b16 %v2156, %v2155
    %v2185 = vpack.c.b16 %v2158, %v2157
    %v2186 = vpack.c.b16 %v2160, %v2159
    %v2187 = vpack.c.b16 %v2162, %v2161
    %v2188 = vpack.c.b16 %v2164, %v2163
    %v2189 = vpack.c.b16 %v2166, %v2165
    %v2190 = vpack.c.b16 %v2168, %v2167
    %v2191 = vpack.c.b16 %v2170, %v2169
    %v2192 = vpack.c.b16 %v2172, %v2171
    %v2193 = vpack.c.b16 %v2174, %v2173
    %v2194 = vpack.c.b16 %v2176, %v2175
    %v2195 = vpack.c.b16 %v2178, %v2177
    %v2196 = vpack.c.b16 %v2180, %v2179
    %2213 = vmatprep.subr.bf16.mxu0 0
    %2214 = vmatpush1.bf16.msra.mxu0 %v2188
    %2215 = vmatprep.subr.bf16.mxu0 0
    %2216 = vmatpush1.bf16.msra.mxu0 %v2187
    %2217 = vmatprep.subr.bf16.mxu0 0
    %2218 = vmatpush1.bf16.msra.mxu0 %v2186
    %2219 = vmatprep.subr.bf16.mxu0 0
    %2220 = vmatpush1.bf16.msra.mxu0 %v2185
    %2221 = vmatprep.subr.bf16.mxu0 0
    %2222 = vmatpush1.bf16.msra.mxu0 %v2184
    %2223 = vmatprep.subr.bf16.mxu0 0
    %2224 = vmatpush1.bf16.msra.mxu0 %v2183
    %2225 = vmatprep.subr.bf16.mxu0 0
    %2226 = vmatpush1.bf16.msra.mxu0 %v2182
    %2227 = vmatprep.subr.bf16.mxu0 0
    %2228 = vmatpush1.bf16.msra.mxu0 %v2181
    %2229 = vmatprep.subr.bf16.mxu0 0
    %2230 = vmatpush2.bf16.msra.mxu0 %v2196
    %2231 = vmatprep.subr.bf16.mxu0 0
    %2232 = vmatpush2.bf16.msra.mxu0 %v2195
    %2233 = vmatprep.subr.bf16.mxu0 0
    %2234 = vmatpush2.bf16.msra.mxu0 %v2194
    %2235 = vmatprep.subr.bf16.mxu0 0
    %2236 = vmatpush2.bf16.msra.mxu0 %v2193
    %2237 = vmatprep.subr.bf16.mxu0 0
    %2238 = vmatpush2.bf16.msra.mxu0 %v2192
    %2239 = vmatprep.subr.bf16.mxu0 0
    %2240 = vmatpush2.bf16.msra.mxu0 %v2191
    %2241 = vmatprep.subr.bf16.mxu0 0
    %2242 = vmatpush2.bf16.msra.mxu0 %v2190
    %2243 = vmatprep.subr.bf16.mxu0 0
    %2244 = vmatpush2.bf16.msra.mxu0 %v2189
    %2245 = vmatprep.mubr.bf16.mxu0 %v2077
    %2246 = vmatmul.mubr.bf16.gmra.mxu0 %v2076
    %v2247 = vpop.f32.mrf.mxu0
    %v2248 = vadd.f32 %v2115, %v2247
    %v2249 = vpop.f32.mrf.mxu0
    %v2250 = vpop.f32.mrf.mxu0
    %v2251 = vadd.f32 %v2115, %v2250
    %v2252 = vpop.f32.mrf.mxu0
    %2253 = vdwg.mxu0
    %v2254 = vmax.f32 %v2248, 0.0
    %v2255 = vmax.f32 %v2251, 0.0
    %v2256 = vpack.c.bf16 %v2255, %v2254
    %v2257 = vld [vmem:[#allocation12] sm:$0xf]
    %v2258 = vld [vmem:[#allocation12 + $0x4] sm:$0xf]
    %v2259 = vld [vmem:[#allocation12 + $0x8] sm:$0xf]
    %v2260 = vld [vmem:[#allocation12 + $0xc] sm:$0xf]
    %v2261 = vld [vmem:[#allocation12 + $0x10] sm:$0xf]
    %v2262 = vld [vmem:[#allocation12 + $0x14] sm:$0xf]
    %v2263 = vld [vmem:[#allocation12 + $0x18] sm:$0xf]
    %v2264 = vld [vmem:[#allocation12 + $0x1c] sm:$0xf]
    %v2265 = vld [vmem:[#allocation12 + $0x20] sm:$0xf]
    %v2266 = vld [vmem:[#allocation12 + $0x24] sm:$0xf]
    %v2267 = vld [vmem:[#allocation12 + $0x28] sm:$0xf]
    %v2268 = vld [vmem:[#allocation12 + $0x2c] sm:$0xf]
    %v2269 = vld [vmem:[#allocation12 + $0x30] sm:$0xf]
    %v2270 = vld [vmem:[#allocation12 + $0x34] sm:$0xf]
    %v2271 = vld [vmem:[#allocation12 + $0x38] sm:$0xf]
    %v2272 = vld [vmem:[#allocation12 + $0x3c] sm:$0xf]
    %v2273 = vld [vmem:[%s5] sm:$0x1]
    %v2275 = vlaneseq
    %v2276 = vshrl.u32 %v2275, 7
    %v2277 = vsub.s32 0, %v2276
    %v2278 = vrot.slane %v2273, %v2277
    %v2296 = vunpack.c.l.b16 %v2257
    %v2297 = vunpack.c.l.b16 %v2258
    %v2298 = vunpack.c.l.b16 %v2259
    %v2299 = vunpack.c.l.b16 %v2260
    %v2300 = vunpack.c.l.b16 %v2261
    %v2301 = vunpack.c.l.b16 %v2262
    %v2302 = vunpack.c.l.b16 %v2263
    %v2303 = vunpack.c.l.b16 %v2264
    %v2304 = vunpack.c.l.b16 %v2265
    %v2305 = vunpack.c.l.b16 %v2266
    %v2306 = vunpack.c.l.b16 %v2267
    %v2307 = vunpack.c.l.b16 %v2268
    %v2308 = vunpack.c.l.b16 %v2269
    %v2309 = vunpack.c.l.b16 %v2270
    %v2310 = vunpack.c.l.b16 %v2271
    %v2311 = vunpack.c.l.b16 %v2272
    %v2312 = vpack.c.b16 %v2297, %v2296
    %v2313 = vpack.c.b16 %v2299, %v2298
    %v2314 = vpack.c.b16 %v2301, %v2300
    %v2315 = vpack.c.b16 %v2303, %v2302
    %v2316 = vpack.c.b16 %v2305, %v2304
    %v2317 = vpack.c.b16 %v2307, %v2306
    %v2318 = vpack.c.b16 %v2309, %v2308
    %v2319 = vpack.c.b16 %v2311, %v2310
    %2328 = vmatprep.subr.bf16.mxu0 0
    %2329 = vmatpush1.bf16.msra.mxu0 %v2319
    %2330 = vmatprep.subr.bf16.mxu0 0
    %2331 = vmatpush1.bf16.msra.mxu0 %v2318
    %2332 = vmatprep.subr.bf16.mxu0 0
    %2333 = vmatpush1.bf16.msra.mxu0 %v2317
    %2334 = vmatprep.subr.bf16.mxu0 0
    %2335 = vmatpush1.bf16.msra.mxu0 %v2316
    %2336 = vmatprep.subr.bf16.mxu0 0
    %2337 = vmatpush1.bf16.msra.mxu0 %v2315
    %2338 = vmatprep.subr.bf16.mxu0 0
    %2339 = vmatpush1.bf16.msra.mxu0 %v2314
    %2340 = vmatprep.subr.bf16.mxu0 0
    %2341 = vmatpush1.bf16.msra.mxu0 %v2313
    %2342 = vmatprep.subr.bf16.mxu0 0
    %2343 = vmatpush1.bf16.msra.mxu0 %v2312
    %2344 = vmatprep.subr.bf16.mxu0 0
    %2345 = vmatpush2.bf16.msra.mxu0 0
    %2346 = vmatprep.subr.bf16.mxu0 0
    %2347 = vmatpush2.bf16.msra.mxu0 0
    %2348 = vmatprep.subr.bf16.mxu0 0
    %2349 = vmatpush2.bf16.msra.mxu0 0
    %2350 = vmatprep.subr.bf16.mxu0 0
    %2351 = vmatpush2.bf16.msra.mxu0 0
    %2352 = vmatprep.subr.bf16.mxu0 0
    %2353 = vmatpush2.bf16.msra.mxu0 0
    %2354 = vmatprep.subr.bf16.mxu0 0
    %2355 = vmatpush2.bf16.msra.mxu0 0
    %2356 = vmatprep.subr.bf16.mxu0 0
    %2357 = vmatpush2.bf16.msra.mxu0 0
    %2358 = vmatprep.subr.bf16.mxu0 0
    %2359 = vmatpush2.bf16.msra.mxu0 0
    %2360 = vmatprep.mubr.bf16.mxu0 0
    %2361 = vmatmul.mubr.bf16.gmra.mxu0 %v2256
    %v2362 = vpop.f32.mrf.mxu0
    %v2363 = vadd.f32 %v2278, %v2362
    %v2364 = vpop.f32.mrf.mxu0
    %v2365 = vpop.f32.mrf.mxu0
    %v2366 = vadd.f32 %v2278, %v2365
    %v2367 = vpop.f32.mrf.mxu0
    %2368 = vdwg.mxu0
    %v2369 = vld [vmem:[%s6] sm:$0x1]
    %v2371 = vlaneseq
    %v2372 = vshrl.u32 %v2371, 7
    %v2373 = vsub.s32 0, %v2372
    %v2374 = vrot.slane %v2369, %v2373
    %v2376 = vmul.f32 %v2254, %v2374
    %v2377 = vmul.f32 %v2255, %v2374
    %2378 = vadd.xlane.f32.xlu0 %v2376
    %v2379 = vpop.xlane.xlu0 %2378
    %2380 = vadd.xlane.f32.xlu0 %v2377
    %v2381 = vpop.xlane.xlu0 %2380
    %v2382 = vld [vmem:[#allocation7] sm:$0x1]
    %v2384 = vlaneseq
    %v2385 = vshrl.u32 %v2384, 7
    %v2386 = vsub.s32 0, %v2385
    %v2387 = vrot.slane %v2382, %v2386
    %v2389 = vadd.f32 %v2379, %v2387
    %v2390 = vadd.f32 %v2381, %v2387
    %2391 = vadd.xlane.f32.xlu0 %v2363
    %v2392 = vpop.xlane.xlu0 %2391
    %2393 = vadd.xlane.f32.xlu0 %v2366
    %v2394 = vpop.xlane.xlu0 %2393
    %v2395 = vmul.f32 %v2392, 0.125
    %v2396 = vmul.f32 %v2394, 0.125
    %2398 = vset.pattern.permute.xlu0 0
    %2399 = vperm.xlu0 %2398, %v2389
    %v2400 = vpop.permute.xlu0 %2399
    %2403 = vset.pattern.permute.xlu0 0
    %2404 = vperm.xlu0 %2403, %v2390
    %v2405 = vpop.permute.xlu0 %2404
    %v2407 = vadd.f32 %v2400, %v2363
    %v2408 = vadd.f32 %v2405, %v2366
    %v2409 = vsub.f32 %v2407, %v2395
    %v2410 = vsub.f32 %v2408, %v2396
    %2411 = vst [vmem:[%s10] sm:$0xff] %v2409
    %2412 = vst [vmem:[%s10 + $0x8] sm:$0xff] %v2410
    // Predicated region
    $region50: #{dueling_forward.2} parent=1 // pred_check
      _
    $region51: #{dueling_forward.2} parent=1 // pred_check_branch
      %2414 = sbr.rel (0) target = $region53
    $region52: #{dueling_forward.2} parent=1 // pred_region
      _
    $region53: #{dueling_forward.2} parent=1 // pred_fallthru
      _
    // Predicated region
    $region54: #{dueling_forward.2} parent=1 // pred_check
      _
    $region55: #{dueling_forward.2} parent=1 // pred_check_branch
      %2416 = sbr.rel (0) target = $region57
    $region56: #{dueling_forward.2} parent=1 // pred_region
      _
    $region57: #{dueling_forward.2} parent=1 // pred_fallthru
      _
    %2417 = vsyncpa [#allocation9], 1
    %2418 = vsyncpa [#allocation11], 1

</llo_original>
